<compile_context>
chip_gen: v7x
topology: tpu7x:2x2x1
jax: 0.10.0
libtpu: 0.0.40
codegen_flags: <defaults>
</compile_context>

<pallas_src>
import functools

import jax
import jax.numpy as jnp
from jax import lax
from jax.experimental import pallas as pl
from jax.experimental.pallas import tpu as pltpu


# -----------------------------------------------------------------------------
# Pallas kernel: one (Cin, L=Nb*HW) lane-dense slab per grid step.
# -----------------------------------------------------------------------------
def shuffle_unit_kernel(x_ref, w1_ref, c1_ref, wt_ref, ct_ref, m_ref, o_ref,
                        *, W, use_bf16_mxu=False):
    x = x_ref[...]                                         # (Cin, L), f32
    L = x.shape[1]
    mxu_dt = jnp.bfloat16 if use_bf16_mxu else jnp.float32

    # unit_1: grouped 1x1 conv + bias + BN1 + ReLU, channel_shuffle permutation
    # pre-folded into the rows of w1/c1 (wrapper glue).
    u1 = jnp.dot(w1_ref[...].astype(mxu_dt), x.astype(mxu_dt),
                 preferred_element_type=jnp.float32) + c1_ref[...]
    u1 = jnp.maximum(u1, 0.0)                              # (Cb, L)

    # 3x3 im2col slab (9*Cb, L): XLU lane-rolls + precomputed border masks.
    # Masks are 0 at image borders, so roll wrap-around and cross-image bleed
    # (batch is folded into the lane axis) are both zeroed.
    masks = m_ref[...]                                     # (9, L), f32 {0,1}
    blocks = []
    tap = 0
    for dy in (-1, 0, 1):
        for dx in (-1, 0, 1):
            shift = (-(dy * W + dx)) % L                   # static, non-negative
            shifted = pltpu.roll(u1, shift, axis=1) if shift else u1
            blocks.append(shifted * masks[tap:tap + 1, :])
            tap += 1
    im2col = jnp.concatenate(blocks, axis=0)               # (9*Cb, L)

    # Folded tail: conv3x3 + b3 + BN2 + conv1x1 + b4 as one K=9*Cb matmul.
    y = jnp.dot(wt_ref[...].astype(mxu_dt), im2col.astype(mxu_dt),
                preferred_element_type=jnp.float32) + ct_ref[...]

    # end_op == 'Add' (stride=1): residual add with the input (Cin == Cout).
    o_ref[...] = (x + y).astype(o_ref.dtype)               # (Cout, L) lane-dense


# -----------------------------------------------------------------------------
# Precomputed 3x3 border masks, tiled across Nb images along the lane axis.
# -----------------------------------------------------------------------------
def build_border_masks(H, W, Nb):
    yy, xx = jnp.meshgrid(jnp.arange(H), jnp.arange(W), indexing="ij")
    yy = yy.reshape(-1)
    xx = xx.reshape(-1)
    rows = []
    for dy in (-1, 0, 1):
        for dx in (-1, 0, 1):
            ok = ((yy + dy >= 0) & (yy + dy < H) &
                  (xx + dx >= 0) & (xx + dx < W))
            rows.append(ok)
    m = jnp.stack(rows, axis=0).astype(jnp.float32)        # (9, HW)
    return jnp.tile(m, (1, Nb))                            # (9, Nb*HW)


# -----------------------------------------------------------------------------
# Wrapper: one transpose into the lane-dense layout + pallas_call.
# -----------------------------------------------------------------------------
def shuffle_unit_pallas(x_nchw, kp, *, min_steps=2, max_images_per_step=8,
                        use_bf16_mxu=False):
    N, Cin, H, W = x_nchw.shape
    Cb = kp["w1"].shape[0]
    Cout = kp["wt"].shape[0]
    HW = H * W

    # >= 2 parallel steps for v7x's two TCs; cap images/step for the VMEM budget.
    num_steps = max(min_steps, -(-N // max_images_per_step))
    num_steps = max(1, min(num_steps, N))
    Nb = -(-N // num_steps)                                # images per grid step
    Np = Nb * num_steps
    if Np != N:
        x_nchw = jnp.pad(x_nchw, ((0, Np - N), (0, 0), (0, 0), (0, 0)))
    L = Nb * HW                                            # lanes per grid step

    # One wrapper transpose into the lane-dense (channels, batch*spatial) layout.
    x_cl = x_nchw.reshape(Np, Cin, HW).transpose(1, 0, 2).reshape(Cin, Np * HW)
    masks = build_border_masks(H, W, Nb)                   # (9, L)

    # Per-step VMEM working set (x/out double-buffered, u1 + im2col + weights).
    per_step = 4 * L * (2 * Cin + 2 * Cout + 10 * Cb + 9) \
        + 4 * (Cb * Cin + Cout * 9 * Cb + Cb + Cout)
    vmem_limit = int(min(64 * 2**20, max(16 * 2**20, 2 * per_step)))

    kernel = functools.partial(shuffle_unit_kernel, W=W,
                               use_bf16_mxu=use_bf16_mxu)

    out_cl = pl.pallas_call(
        kernel,
        out_shape=jax.ShapeDtypeStruct((Cout, Np * HW), jnp.float32),
        grid=(num_steps,),
        in_specs=[
            pl.BlockSpec((Cin, L), lambda s: (0, s)),        # x slab (per step)
            pl.BlockSpec((Cb, Cin), lambda s: (0, 0)),       # w1 (folded + perm)
            pl.BlockSpec((Cb, 1), lambda s: (0, 0)),         # c1
            pl.BlockSpec((Cout, 9 * Cb), lambda s: (0, 0)),  # wt (folded tail)
            pl.BlockSpec((Cout, 1), lambda s: (0, 0)),       # ct
            pl.BlockSpec((9, L), lambda s: (0, 0)),          # border masks
        ],
        out_specs=pl.BlockSpec((Cout, L), lambda s: (0, s)),
        compiler_params=pltpu.CompilerParams(
            dimension_semantics=("parallel",),
            vmem_limit_bytes=vmem_limit),
    )(x_cl, kp["w1"], kp["c1"], kp["wt"], kp["ct"], masks)

    out = out_cl.reshape(Cout, Np, HW).transpose(1, 0, 2).reshape(Np, Cout, H, W)
    return out[:N]


# -----------------------------------------------------------------------------
# Parameter setup (deterministic, synthetic) and weight-folding glue.
# -----------------------------------------------------------------------------
def init_params(key, in_chans, out_chans, n_groups):
    bottle = out_chans // 4
    ks = jax.random.split(key, 14)
    p = {
        "w1": 0.1 * jax.random.normal(ks[0], (bottle, in_chans // n_groups, 1, 1), jnp.float32),
        "b1": 0.1 * jax.random.normal(ks[1], (bottle,), jnp.float32),
        "g1": 1.0 + 0.1 * jax.random.normal(ks[2], (bottle,), jnp.float32),
        "be1": 0.1 * jax.random.normal(ks[3], (bottle,), jnp.float32),
        "m1": 0.1 * jax.random.normal(ks[4], (bottle,), jnp.float32),
        "v1": 1.0 + 0.1 * jnp.abs(jax.random.normal(ks[5], (bottle,), jnp.float32)),
        "w3": 0.1 * jax.random.normal(ks[6], (bottle, bottle // n_groups, 3, 3), jnp.float32),
        "b3": 0.1 * jax.random.normal(ks[7], (bottle,), jnp.float32),
        "g2": 1.0 + 0.1 * jax.random.normal(ks[8], (bottle,), jnp.float32),
        "be2": 0.1 * jax.random.normal(ks[9], (bottle,), jnp.float32),
        "m2": 0.1 * jax.random.normal(ks[10], (bottle,), jnp.float32),
        "v2": 1.0 + 0.1 * jnp.abs(jax.random.normal(ks[11], (bottle,), jnp.float32)),
        "w4": 0.1 * jax.random.normal(ks[12], (out_chans, bottle // n_groups, 1, 1), jnp.float32),
        "b4": 0.1 * jax.random.normal(ks[13], (out_chans,), jnp.float32),
    }
    return p


def grouped_1x1_dense(w_oihw, n_groups):
    """Grouped 1x1 conv weight -> dense block-diagonal (O, I)."""
    O, Ig, _, _ = w_oihw.shape
    I = Ig * n_groups
    Og = O // n_groups
    dense = jnp.zeros((O, I), jnp.float32)
    for g in range(n_groups):
        blk = w_oihw[g * Og:(g + 1) * Og, :, 0, 0]            # (Og, Ig)
        dense = dense.at[g * Og:(g + 1) * Og, g * Ig:(g + 1) * Ig].set(blk)
    return dense


def grouped_3x3_dense(w_oihw, n_groups):
    """Grouped 3x3 conv weight -> dense block-diagonal (O, I, 3, 3)."""
    O, Ig, KH, KW = w_oihw.shape
    I = Ig * n_groups
    Og = O // n_groups
    dense = jnp.zeros((O, I, KH, KW), jnp.float32)
    for g in range(n_groups):
        dense = dense.at[g * Og:(g + 1) * Og, g * Ig:(g + 1) * Ig].set(
            w_oihw[g * Og:(g + 1) * Og])
    return dense


def build_kernel_params(p, n_groups, eps=1e-5):
    G = n_groups
    s1 = p["g1"] / jnp.sqrt(p["v1"] + eps)
    t1 = p["be1"] - p["m1"] * s1
    s2 = p["g2"] / jnp.sqrt(p["v2"] + eps)
    t2 = p["be2"] - p["m2"] * s2

    w1d = grouped_1x1_dense(p["w1"], G)      # (Cb, Cin)
    w3d = grouped_3x3_dense(p["w3"], G)      # (Cb, Cb, 3, 3)
    w4d = grouped_1x1_dense(p["w4"], G)      # (Cout, Cb)
    Cb = w1d.shape[0]

    # --- unit_1 fold: relu((s1*W1) @ x + (s1*b1 + t1)), with the
    # channel_shuffle permutation applied to the OUTPUT rows.
    w1_eff = s1[:, None] * w1d               # (Cb, Cin)
    c1 = s1 * p["b1"] + t1                   # (Cb,)
    perm = (jnp.arange(Cb) % G) * (Cb // G) + (jnp.arange(Cb) // G)
    w1_eff = w1_eff[perm]
    c1 = c1[perm]

    # --- tail fold:  y = W4 @ (s2*(W3 (*) u1 + b3) + t2) + b4
    #              =  (W4*s2) @ W3_stacked @ im2col + (W4*s2)@b3 + W4@t2 + b4
    # W3_stacked columns ordered tap-major to match the kernel's im2col blocks:
    # taps (dy,dx) = (-1,-1),(-1,0),...,(1,1).
    w4s = w4d * s2[None, :]                  # (Cout, Cb)
    w3_stacked = jnp.concatenate(
        [w3d[:, :, ky, kx] for ky in range(3) for kx in range(3)], axis=1)  # (Cb, 9*Cb)
    wt = jnp.dot(w4s, w3_stacked)            # (Cout, 9*Cb)
    ct = jnp.dot(w4s, p["b3"]) + jnp.dot(w4d, t2) + p["b4"]                 # (Cout,)

    return {
        "w1": w1_eff,
        "c1": c1[:, None],
        "wt": wt,
        "ct": ct[:, None],
    }


# -----------------------------------------------------------------------------
# Plain-JAX reference (NCHW, matching PyTorch eval-mode semantics).
# -----------------------------------------------------------------------------
def shuffle_unit_reference(x, p, n_groups, eps=1e-5):
    G = n_groups
    dn = ("NCHW", "OIHW", "NCHW")

    def bn(y, g, be, m, v):
        s = (g / jnp.sqrt(v + eps))[None, :, None, None]
        return (y - m[None, :, None, None]) * s + be[None, :, None, None]

    y = lax.conv_general_dilated(x, p["w1"], (1, 1), "VALID",
                                 feature_group_count=G, dimension_numbers=dn)
    y = y + p["b1"][None, :, None, None]
    y = jnp.maximum(bn(y, p["g1"], p["be1"], p["m1"], p["v1"]), 0.0)
    B, C, H, W = y.shape
    y = y.reshape(B, G, C // G, H, W).transpose(0, 2, 1, 3, 4).reshape(B, C, H, W)
    y = lax.conv_general_dilated(y, p["w3"], (1, 1), ((1, 1), (1, 1)),
                                 feature_group_count=G, dimension_numbers=dn)
    y = y + p["b3"][None, :, None, None]
    y = bn(y, p["g2"], p["be2"], p["m2"], p["v2"])
    y = lax.conv_general_dilated(y, p["w4"], (1, 1), "VALID",
                                 feature_group_count=G, dimension_numbers=dn)
    y = y + p["b4"][None, :, None, None]
    return x + y   # end_op == 'Add'


if __name__ == "__main__":
    # ShuffleUnit(in_chans=32, out_chans=32, stride=1, n_groups=4)
    # batch=8 so the batched kernel actually folds 4 images per grid step
    # (grid=(2,), parallel) while staying small.
    N, C, H, W = 8, 32, 16, 16
    G = 4

    key = jax.random.PRNGKey(0)
    kx, kparam = jax.random.split(key)
    x_nchw = jax.random.normal(kx, (N, C, H, W), jnp.float32)

    params = init_params(kparam, C, C, G)
    kparams = build_kernel_params(params, G)

    # use_bf16_mxu=False here so the result matches the f32 reference exactly;
    # flip it on for production channel counts (v6e/v7x MXU lever).
    out = shuffle_unit_pallas(x_nchw, kparams, use_bf16_mxu=False)
    out = jax.block_until_ready(out)

    ref = shuffle_unit_reference(x_nchw, params, G)
    assert out.shape == ref.shape == (N, C, H, W)
    err = float(jnp.max(jnp.abs(out - ref)))
    if err > 1e-3:
        raise AssertionError(f"mismatch vs reference: max abs err = {err}")
    print("KERNEL_OK")
</pallas_src>

<mosaic_0001>
module attributes {stable_mosaic.version = 11 : i64} {
  func.func @shuffle_unit_kernel(%arg0: i32, %arg1: memref<32x1024xf32, #tpu.memory_space<vmem>>, %arg2: memref<8x32xf32, #tpu.memory_space<vmem>>, %arg3: memref<8x1xf32, #tpu.memory_space<vmem>>, %arg4: memref<32x72xf32, #tpu.memory_space<vmem>>, %arg5: memref<32x1xf32, #tpu.memory_space<vmem>>, %arg6: memref<9x1024xf32, #tpu.memory_space<vmem>>, %arg7: memref<32x1024xf32, #tpu.memory_space<vmem>>) attributes {dimension_semantics = [#tpu.dimension_semantics<parallel>], iteration_bounds = array<i64: 2>, scalar_prefetch = 0 : i64, scratch_operands = 0 : i64, tpu.core_type = #tpu.core_type<tc>, window_params = [{transform_indices = @transform_0, window_bounds = array<i64: 32, 1024>}, {pipeline_mode = #tpu.pipeline_mode<synchronous>, transform_indices = @transform_1, window_bounds = array<i64: 8, 32>}, {pipeline_mode = #tpu.pipeline_mode<synchronous>, transform_indices = @transform_2, window_bounds = array<i64: 8, 1>}, {pipeline_mode = #tpu.pipeline_mode<synchronous>, transform_indices = @transform_3, window_bounds = array<i64: 32, 72>}, {pipeline_mode = #tpu.pipeline_mode<synchronous>, transform_indices = @transform_4, window_bounds = array<i64: 32, 1>}, {pipeline_mode = #tpu.pipeline_mode<synchronous>, transform_indices = @transform_5, window_bounds = array<i64: 9, 1024>}, {transform_indices = @transform_6, window_bounds = array<i64: 32, 1024>}]} {
    %c0 = arith.constant 0 : index
    %c0_0 = arith.constant 0 : index
    %0 = vector.load %arg1[%c0, %c0_0] : memref<32x1024xf32, #tpu.memory_space<vmem>>, vector<32x1024xf32>
    %c0_1 = arith.constant 0 : index
    %c0_2 = arith.constant 0 : index
    %1 = vector.load %arg2[%c0_1, %c0_2] : memref<8x32xf32, #tpu.memory_space<vmem>>, vector<8x32xf32>
    %cst = arith.constant dense<0.000000e+00> : vector<8x1024xf32>
    %2 = tpu.matmul %1, %0, %cst {dimension_numbers = #tpu.dot_dimension_numbers<[1], [0], [0], [1], [0, 0, 1, 1], [], []>} : vector<8x32xf32>, vector<32x1024xf32>, vector<8x1024xf32> -> vector<8x1024xf32>
    %c0_3 = arith.constant 0 : index
    %c0_4 = arith.constant 0 : index
    %3 = vector.load %arg3[%c0_3, %c0_4] : memref<8x1xf32, #tpu.memory_space<vmem>>, vector<8x1xf32>
    %4 = vector.broadcast %3 : vector<8x1xf32> to vector<8x1024xf32>
    %5 = arith.addf %2, %4 : vector<8x1024xf32>
    %cst_5 = arith.constant 0.000000e+00 : f32
    %6 = vector.broadcast %cst_5 : f32 to vector<8x1024xf32>
    %7 = arith.maximumf %5, %6 : vector<8x1024xf32>
    %c0_6 = arith.constant 0 : index
    %c0_7 = arith.constant 0 : index
    %8 = vector.load %arg6[%c0_6, %c0_7] : memref<9x1024xf32, #tpu.memory_space<vmem>>, vector<9x1024xf32>
    %c17_i32 = arith.constant 17 : i32
    %9 = tpu.dynamic_rotate %7 by %c17_i32 dim 1 : vector<8x1024xf32>, i32 -> vector<8x1024xf32>
    %10 = vector.extract_strided_slice %8 {offsets = [0, 0], sizes = [1, 1024], strides = [1, 1]} : vector<9x1024xf32> to vector<1x1024xf32>
    %11 = vector.broadcast %10 : vector<1x1024xf32> to vector<8x1024xf32>
    %12 = arith.mulf %9, %11 : vector<8x1024xf32>
    %c16_i32 = arith.constant 16 : i32
    %13 = tpu.dynamic_rotate %7 by %c16_i32 dim 1 : vector<8x1024xf32>, i32 -> vector<8x1024xf32>
    %14 = vector.extract_strided_slice %8 {offsets = [1, 0], sizes = [1, 1024], strides = [1, 1]} : vector<9x1024xf32> to vector<1x1024xf32>
    %15 = vector.broadcast %14 : vector<1x1024xf32> to vector<8x1024xf32>
    %16 = arith.mulf %13, %15 : vector<8x1024xf32>
    %c15_i32 = arith.constant 15 : i32
    %17 = tpu.dynamic_rotate %7 by %c15_i32 dim 1 : vector<8x1024xf32>, i32 -> vector<8x1024xf32>
    %18 = vector.extract_strided_slice %8 {offsets = [2, 0], sizes = [1, 1024], strides = [1, 1]} : vector<9x1024xf32> to vector<1x1024xf32>
    %19 = vector.broadcast %18 : vector<1x1024xf32> to vector<8x1024xf32>
    %20 = arith.mulf %17, %19 : vector<8x1024xf32>
    %c1_i32 = arith.constant 1 : i32
    %21 = tpu.dynamic_rotate %7 by %c1_i32 dim 1 : vector<8x1024xf32>, i32 -> vector<8x1024xf32>
    %22 = vector.extract_strided_slice %8 {offsets = [3, 0], sizes = [1, 1024], strides = [1, 1]} : vector<9x1024xf32> to vector<1x1024xf32>
    %23 = vector.broadcast %22 : vector<1x1024xf32> to vector<8x1024xf32>
    %24 = arith.mulf %21, %23 : vector<8x1024xf32>
    %25 = vector.extract_strided_slice %8 {offsets = [4, 0], sizes = [1, 1024], strides = [1, 1]} : vector<9x1024xf32> to vector<1x1024xf32>
    %26 = vector.broadcast %25 : vector<1x1024xf32> to vector<8x1024xf32>
    %27 = arith.mulf %7, %26 : vector<8x1024xf32>
    %c1023_i32 = arith.constant 1023 : i32
    %28 = tpu.dynamic_rotate %7 by %c1023_i32 dim 1 : vector<8x1024xf32>, i32 -> vector<8x1024xf32>
    %29 = vector.extract_strided_slice %8 {offsets = [5, 0], sizes = [1, 1024], strides = [1, 1]} : vector<9x1024xf32> to vector<1x1024xf32>
    %30 = vector.broadcast %29 : vector<1x1024xf32> to vector<8x1024xf32>
    %31 = arith.mulf %28, %30 : vector<8x1024xf32>
    %c1009_i32 = arith.constant 1009 : i32
    %32 = tpu.dynamic_rotate %7 by %c1009_i32 dim 1 : vector<8x1024xf32>, i32 -> vector<8x1024xf32>
    %33 = vector.extract_strided_slice %8 {offsets = [6, 0], sizes = [1, 1024], strides = [1, 1]} : vector<9x1024xf32> to vector<1x1024xf32>
    %34 = vector.broadcast %33 : vector<1x1024xf32> to vector<8x1024xf32>
    %35 = arith.mulf %32, %34 : vector<8x1024xf32>
    %c1008_i32 = arith.constant 1008 : i32
    %36 = tpu.dynamic_rotate %7 by %c1008_i32 dim 1 : vector<8x1024xf32>, i32 -> vector<8x1024xf32>
    %37 = vector.extract_strided_slice %8 {offsets = [7, 0], sizes = [1, 1024], strides = [1, 1]} : vector<9x1024xf32> to vector<1x1024xf32>
    %38 = vector.broadcast %37 : vector<1x1024xf32> to vector<8x1024xf32>
    %39 = arith.mulf %36, %38 : vector<8x1024xf32>
    %c1007_i32 = arith.constant 1007 : i32
    %40 = tpu.dynamic_rotate %7 by %c1007_i32 dim 1 : vector<8x1024xf32>, i32 -> vector<8x1024xf32>
    %41 = vector.extract_strided_slice %8 {offsets = [8, 0], sizes = [1, 1024], strides = [1, 1]} : vector<9x1024xf32> to vector<1x1024xf32>
    %42 = vector.broadcast %41 : vector<1x1024xf32> to vector<8x1024xf32>
    %43 = arith.mulf %40, %42 : vector<8x1024xf32>
    %44 = tpu.concatenate %12, %16, %20, %24, %27, %31, %35, %39, %43 in 0 : vector<8x1024xf32>, vector<8x1024xf32>, vector<8x1024xf32>, vector<8x1024xf32>, vector<8x1024xf32>, vector<8x1024xf32>, vector<8x1024xf32>, vector<8x1024xf32>, vector<8x1024xf32> -> vector<72x1024xf32>
    %c0_8 = arith.constant 0 : index
    %c0_9 = arith.constant 0 : index
    %45 = vector.load %arg4[%c0_8, %c0_9] : memref<32x72xf32, #tpu.memory_space<vmem>>, vector<32x72xf32>
    %cst_10 = arith.constant dense<0.000000e+00> : vector<32x1024xf32>
    %46 = tpu.matmul %45, %44, %cst_10 {dimension_numbers = #tpu.dot_dimension_numbers<[1], [0], [0], [1], [0, 0, 1, 1], [], []>} : vector<32x72xf32>, vector<72x1024xf32>, vector<32x1024xf32> -> vector<32x1024xf32>
    %c0_11 = arith.constant 0 : index
    %c0_12 = arith.constant 0 : index
    %47 = vector.load %arg5[%c0_11, %c0_12] : memref<32x1xf32, #tpu.memory_space<vmem>>, vector<32x1xf32>
    %48 = vector.broadcast %47 : vector<32x1xf32> to vector<32x1024xf32>
    %49 = arith.addf %46, %48 : vector<32x1024xf32>
    %50 = arith.addf %0, %49 : vector<32x1024xf32>
    %c0_13 = arith.constant 0 : index
    %c0_14 = arith.constant 0 : index
    %51 = vector.load %arg7[%c0_13, %c0_14] : memref<32x1024xf32, #tpu.memory_space<vmem>>, vector<32x1024xf32>
    tpu.vector_store %arg7[%c0_13, %c0_14], %50 {strides = array<i32>} : memref<32x1024xf32, #tpu.memory_space<vmem>>, vector<32x1024xf32>,
    return
  }
  func.func @transform_0(%arg0: i32) -> (i32, i32) {
    %c0_i32 = arith.constant 0 : i32
    %c0_i32_0 = arith.constant 0 : i32
    return %c0_i32, %arg0 : i32, i32
  }
  func.func @transform_1(%arg0: i32) -> (i32, i32) {
    %c0_i32 = arith.constant 0 : i32
    %c0_i32_0 = arith.constant 0 : i32
    %c0_i32_1 = arith.constant 0 : i32
    return %c0_i32, %c0_i32_0 : i32, i32
  }
  func.func @transform_2(%arg0: i32) -> (i32, i32) {
    %c0_i32 = arith.constant 0 : i32
    %c0_i32_0 = arith.constant 0 : i32
    %c0_i32_1 = arith.constant 0 : i32
    return %c0_i32, %c0_i32_0 : i32, i32
  }
  func.func @transform_3(%arg0: i32) -> (i32, i32) {
    %c0_i32 = arith.constant 0 : i32
    %c0_i32_0 = arith.constant 0 : i32
    %c0_i32_1 = arith.constant 0 : i32
    return %c0_i32, %c0_i32_0 : i32, i32
  }
  func.func @transform_4(%arg0: i32) -> (i32, i32) {
    %c0_i32 = arith.constant 0 : i32
    %c0_i32_0 = arith.constant 0 : i32
    %c0_i32_1 = arith.constant 0 : i32
    return %c0_i32, %c0_i32_0 : i32, i32
  }
  func.func @transform_5(%arg0: i32) -> (i32, i32) {
    %c0_i32 = arith.constant 0 : i32
    %c0_i32_0 = arith.constant 0 : i32
    %c0_i32_1 = arith.constant 0 : i32
    return %c0_i32, %c0_i32_0 : i32, i32
  }
  func.func @transform_6(%arg0: i32) -> (i32, i32) {
    %c0_i32 = arith.constant 0 : i32
    %c0_i32_0 = arith.constant 0 : i32
    return %c0_i32, %arg0 : i32, i32
  }
}

</mosaic_0001>

<llo_original>
// kernel: tpu_custom_call.1
$region0: #{tpu_custom_call.1}
  #allocation0 [shape = 'u32[]', space=smem, size = 0x4, offset = 0x4, fixed_abs, tag = 'smem constant byte address 0x4 - core index']
  #allocation1 [shape = 'u32[144,128]{1,0:T(1,128)}', space=vmem, size = 0x12000, scoped, tag = 'internal scratch']
  %s0 = inlined_call_operand.hbm [shape: f32[32,2048], index: 0, kind: input, shape index: {}]
  %s1 = inlined_call_operand.vmem [shape: f32[8,32], index: 1, kind: input, shape index: {}]
  %s2 = inlined_call_operand.vmem [shape: f32[8,1], index: 2, kind: input, shape index: {}]
  %s3 = inlined_call_operand.vmem [shape: f32[32,72], index: 3, kind: input, shape index: {}]
  %s4 = inlined_call_operand.vmem [shape: f32[32,1], index: 4, kind: input, shape index: {}]
  %s5 = inlined_call_operand.hbm [shape: f32[9,1024], index: 5, kind: input, shape index: {}]
  %s6 = inlined_call_operand.hbm [shape: f32[32,2048], index: 6, kind: output, shape index: {}]
  %s7 = sld [smem:[#allocation0]]
  $region65: #{tpu_custom_call.1} parent=0
    _
  %s9 = ssub.s32 1, %s7
  %s10 = scalar_select 0, %s9, %s7
  $region1: #{tpu_custom_call.1} parent=0
    #allocation2 [shape = 'u8[262144]{0}', space=vmem, size = 0x40000, scoped, tag = 'input window, operand 0']
    #allocation3 [shape = 's32[2]{0}', space=sflag, size = 0x8, scoped, tag = 'scoped memory for tpu_custom_call.1']
    #allocation4 [shape = 's32[2]{0}', space=sflag, size = 0x8, scoped, tag = 'scoped memory for tpu_custom_call.1']
    #allocation5 [shape = 'u8[65536]{0}', space=vmem, size = 0x10000, scoped, tag = 'input window, operand 5, single buffered']
    #allocation6 [shape = 's32[1]{0}', space=sflag, size = 0x4, scoped, tag = 'scoped memory for tpu_custom_call.1']
    #allocation7 [shape = 'u8[262144]{0}', space=vmem, size = 0x40000, scoped, tag = 'output window, operand 0']
    %11 = vsyncpa [#allocation3], 0
    %s12 = scalar_lea.sflag [#allocation3], 1
    %13 = vsyncpa %s12, 0
    %14 = vsyncpa [#allocation6], 0
    %15 = vsyncpa [#allocation4], 0
    %s16 = scalar_lea.sflag [#allocation4], 1
    %17 = vsyncpa %s16, 0
    loop: start=0, step=1, limit=4
    $region2: #{tpu_custom_call.1} parent=1 // loop_pre_header
      _
    $region3: #{tpu_custom_call.1} parent=1 // loop_header
      %s19 = sphi 0, %s23
      %p20 = scmp.ge.s32.totalorder %s19, 4
      %s29 = sphi 0, %s31
      %s32 = sphi 0, %s29
      %s33 = sphi 0, %s32
      %s49 = sphi 0, %s33
      %s53 = sphi 0, %s53
      %s55 = sphi 0, %s53
      %s56 = sphi 0, %s55
      %s70 = sphi 0, %s56
      %s74 = sphi 0, %s74
      %s76 = sphi 0, %s74
      %s77 = sphi 0, %s76
      %s91 = sphi 0, %s77
      %s95 = sphi 0, %s95
      %s97 = sphi 0, %s95
      %s98 = sphi 0, %s97
      %s112 = sphi 0, %s98
      %s116 = sphi 0, %s116
      %s118 = sphi 0, %s116
      %s119 = sphi 0, %s118
      %s133 = sphi 0, %s119
      %s137 = sphi 0, %s137
      %s139 = sphi 0, %s137
      %s140 = sphi 0, %s139
      %s154 = sphi 0, %s140
      %s160 = sphi 0, %s162
      %s163 = sphi 0, %s160
      %s164 = sphi 0, %s163
      %s180 = sphi 0, %s164
    $region4: #{tpu_custom_call.1} parent=1 // loop_header_branch
      %22 = sbr.rel (%p20) target = $region8
    $region5: #{tpu_custom_call.1} parent=1 // loop_body
      %s24 = ssub.s32 %s19, 1
      %s25 = ssub.s32 %s19, 2
      %s26 = sadd.s32 %s19, 1
      %s27 = ssub.s32 %s19, %s26
      %p28 = scmp.eq.s32.totalorder %s27, 0
      %s30 = sadd.s32 %s29, 1
      %s31 = scalar_select %p28, %s29, %s30
      %p34 = pneg %p28
      %p35 = scmp.eq.s32.totalorder %s19, 1
      %p36 = por %p34, %p35
      %p37 = scmp.ne.s32.totalorder %s29, %s32
      %p38 = scmp.eq.s32.totalorder %s19, 0
      %p39 = por %p37, %p38
      %p40 = scmp.ne.s32.totalorder %s29, %s32
      %p41 = scmp.eq.s32.totalorder %s24, 1
      %p42 = por %p40, %p41
      %p43 = scmp.ne.s32.totalorder %s32, %s33
      %p44 = scmp.eq.s32.totalorder %s24, 0
      %p45 = por %p43, %p44
      %p46 = scmp.ne.s32.totalorder %s32, %s33
      %p47 = scmp.eq.s32.totalorder %s25, 1
      %p48 = por %p46, %p47
      %p50 = scmp.ne.s32.totalorder %s33, %s49
      %p51 = scmp.eq.s32.totalorder %s25, 0
      %p52 = por %p50, %p51
      %s54 = sadd.s32 %s53, 1
      %p57 = scmp.eq.s32.totalorder %s19, 1
      %p58 = scmp.ne.s32.totalorder %s53, %s55
      %p59 = scmp.eq.s32.totalorder %s19, 0
      %p60 = por %p58, %p59
      %p61 = scmp.ne.s32.totalorder %s53, %s55
      %p62 = scmp.eq.s32.totalorder %s24, 1
      %p63 = por %p61, %p62
      %p64 = scmp.ne.s32.totalorder %s55, %s56
      %p65 = scmp.eq.s32.totalorder %s24, 0
      %p66 = por %p64, %p65
      %p67 = scmp.ne.s32.totalorder %s55, %s56
      %p68 = scmp.eq.s32.totalorder %s25, 1
      %p69 = por %p67, %p68
      %p71 = scmp.ne.s32.totalorder %s56, %s70
      %p72 = scmp.eq.s32.totalorder %s25, 0
      %p73 = por %p71, %p72
      %s75 = sadd.s32 %s74, 1
      %p78 = scmp.eq.s32.totalorder %s19, 1
      %p79 = scmp.ne.s32.totalorder %s74, %s76
      %p80 = scmp.eq.s32.totalorder %s19, 0
      %p81 = por %p79, %p80
      %p82 = scmp.ne.s32.totalorder %s74, %s76
      %p83 = scmp.eq.s32.totalorder %s24, 1
      %p84 = por %p82, %p83
      %p85 = scmp.ne.s32.totalorder %s76, %s77
      %p86 = scmp.eq.s32.totalorder %s24, 0
      %p87 = por %p85, %p86
      %p88 = scmp.ne.s32.totalorder %s76, %s77
      %p89 = scmp.eq.s32.totalorder %s25, 1
      %p90 = por %p88, %p89
      %p92 = scmp.ne.s32.totalorder %s77, %s91
      %p93 = scmp.eq.s32.totalorder %s25, 0
      %p94 = por %p92, %p93
      %s96 = sadd.s32 %s95, 1
      %p99 = scmp.eq.s32.totalorder %s19, 1
      %p100 = scmp.ne.s32.totalorder %s95, %s97
      %p101 = scmp.eq.s32.totalorder %s19, 0
      %p102 = por %p100, %p101
      %p103 = scmp.ne.s32.totalorder %s95, %s97
      %p104 = scmp.eq.s32.totalorder %s24, 1
      %p105 = por %p103, %p104
      %p106 = scmp.ne.s32.totalorder %s97, %s98
      %p107 = scmp.eq.s32.totalorder %s24, 0
      %p108 = por %p106, %p107
      %p109 = scmp.ne.s32.totalorder %s97, %s98
      %p110 = scmp.eq.s32.totalorder %s25, 1
      %p111 = por %p109, %p110
      %p113 = scmp.ne.s32.totalorder %s98, %s112
      %p114 = scmp.eq.s32.totalorder %s25, 0
      %p115 = por %p113, %p114
      %s117 = sadd.s32 %s116, 1
      %p120 = scmp.eq.s32.totalorder %s19, 1
      %p121 = scmp.ne.s32.totalorder %s116, %s118
      %p122 = scmp.eq.s32.totalorder %s19, 0
      %p123 = por %p121, %p122
      %p124 = scmp.ne.s32.totalorder %s116, %s118
      %p125 = scmp.eq.s32.totalorder %s24, 1
      %p126 = por %p124, %p125
      %p127 = scmp.ne.s32.totalorder %s118, %s119
      %p128 = scmp.eq.s32.totalorder %s24, 0
      %p129 = por %p127, %p128
      %p130 = scmp.ne.s32.totalorder %s118, %s119
      %p131 = scmp.eq.s32.totalorder %s25, 1
      %p132 = por %p130, %p131
      %p134 = scmp.ne.s32.totalorder %s119, %s133
      %p135 = scmp.eq.s32.totalorder %s25, 0
      %p136 = por %p134, %p135
      %s138 = sadd.s32 %s137, 1
      %p141 = scmp.eq.s32.totalorder %s19, 1
      %p142 = scmp.ne.s32.totalorder %s137, %s139
      %p143 = scmp.eq.s32.totalorder %s19, 0
      %p144 = por %p142, %p143
      %p145 = scmp.ne.s32.totalorder %s137, %s139
      %p146 = scmp.eq.s32.totalorder %s24, 1
      %p147 = por %p145, %p146
      %p148 = scmp.ne.s32.totalorder %s139, %s140
      %p149 = scmp.eq.s32.totalorder %s24, 0
      %p150 = por %p148, %p149
      %p151 = scmp.ne.s32.totalorder %s139, %s140
      %p152 = scmp.eq.s32.totalorder %s25, 1
      %p153 = por %p151, %p152
      %p155 = scmp.ne.s32.totalorder %s140, %s154
      %p156 = scmp.eq.s32.totalorder %s25, 0
      %p157 = por %p155, %p156
      %s158 = ssub.s32 %s19, %s26
      %p159 = scmp.eq.s32.totalorder %s158, 0
      %s161 = sadd.s32 %s160, 1
      %s162 = scalar_select %p159, %s160, %s161
      %p165 = pneg %p159
      %p166 = scmp.eq.s32.totalorder %s19, 1
      %p167 = por %p165, %p166
      %p168 = scmp.ne.s32.totalorder %s160, %s163
      %p169 = scmp.eq.s32.totalorder %s19, 0
      %p170 = por %p168, %p169
      %p171 = scmp.ne.s32.totalorder %s160, %s163
      %p172 = scmp.eq.s32.totalorder %s24, 1
      %p173 = por %p171, %p172
      %p174 = scmp.ne.s32.totalorder %s163, %s164
      %p175 = scmp.eq.s32.totalorder %s24, 0
      %p176 = por %p174, %p175
      %p177 = scmp.ne.s32.totalorder %s163, %s164
      %p178 = scmp.eq.s32.totalorder %s25, 1
      %p179 = por %p177, %p178
      %p181 = scmp.ne.s32.totalorder %s164, %s180
      %p182 = scmp.eq.s32.totalorder %s25, 0
      %p183 = por %p181, %p182
      %p184 = scmp.le.s32.totalorder 1, %s19
      %p185 = scmp.lt.s32.totalorder %s19, 3
      %p186 = pnand %p184, %p185
      %p187 = pneg %p186
      // Predicated region
      $region9: #{tpu_custom_call.1} parent=5 // pred_check
        _
      $region10: #{tpu_custom_call.1} parent=5 // pred_check_branch
        %189 = sbr.rel (%p186) target = $region12
      $region11: #{tpu_custom_call.1} parent=5 // pred_region
        %s190 = ssub.s32 %s19, 1
        // Predicated region
        $region13: #{tpu_custom_call.1} parent=11 // pred_check
          %p191 = pneg %p66
        $region14: #{tpu_custom_call.1} parent=11 // pred_check_branch
          %193 = sbr.rel (%p191) target = $region16
        $region15: #{tpu_custom_call.1} parent=11 // pred_region
          _
        $region16: #{tpu_custom_call.1} parent=11 // pred_fallthru
          _
        // Predicated region
        $region17: #{tpu_custom_call.1} parent=11 // pred_check
          %p194 = pneg %p87
        $region18: #{tpu_custom_call.1} parent=11 // pred_check_branch
          %196 = sbr.rel (%p194) target = $region20
        $region19: #{tpu_custom_call.1} parent=11 // pred_region
          _
        $region20: #{tpu_custom_call.1} parent=11 // pred_fallthru
          _
        // Predicated region
        $region21: #{tpu_custom_call.1} parent=11 // pred_check
          %p197 = pneg %p108
        $region22: #{tpu_custom_call.1} parent=11 // pred_check_branch
          %199 = sbr.rel (%p197) target = $region24
        $region23: #{tpu_custom_call.1} parent=11 // pred_region
          _
        $region24: #{tpu_custom_call.1} parent=11 // pred_fallthru
          _
        // Predicated region
        $region25: #{tpu_custom_call.1} parent=11 // pred_check
          %p200 = pneg %p129
        $region26: #{tpu_custom_call.1} parent=11 // pred_check_branch
          %202 = sbr.rel (%p200) target = $region28
        $region27: #{tpu_custom_call.1} parent=11 // pred_region
          _
        $region28: #{tpu_custom_call.1} parent=11 // pred_fallthru
          _
        // Predicated region
        $region29: #{tpu_custom_call.1} parent=11 // pred_check
          %p203 = pneg %p150
        $region30: #{tpu_custom_call.1} parent=11 // pred_check_branch
          %205 = sbr.rel (%p203) target = $region32
        $region31: #{tpu_custom_call.1} parent=11 // pred_region
          %s207 = ssub.s32 2048, 2048
          %208 = vsyncadd [#allocation6], %s207
          %s209 = sshll.u32 [#allocation5], 4
          %s210 = int_to_ptr.vmem [resolvable:$true] %s209
          %215 = dma.hbm_to_vmem [thread:$0]  %s5, 2048, %s210, [#allocation6], 1024, 1024, 64
        $region32: #{tpu_custom_call.1} parent=11 // pred_fallthru
          _
      $region12: #{tpu_custom_call.1} parent=5 // pred_fallthru
        _
      %p216 = scmp.lt.s32.totalorder %s19, 2
      // Predicated region
      $region33: #{tpu_custom_call.1} parent=5 // pred_check
        %p217 = pneg %p216
      $region34: #{tpu_custom_call.1} parent=5 // pred_check_branch
        %219 = sbr.rel (%p217) target = $region36
      $region35: #{tpu_custom_call.1} parent=5 // pred_region
        // Predicated region
        $region37: #{tpu_custom_call.1} parent=35 // pred_check
          %p220 = pneg %p39
        $region38: #{tpu_custom_call.1} parent=35 // pred_check_branch
          %222 = sbr.rel (%p220) target = $region40
        $region39: #{tpu_custom_call.1} parent=35 // pred_region
          %s223 = sand.u32 %s29, 1
          %s224 = scalar_lea.sflag [#allocation3], %s223
          %s225 = sand.u32 %s29, 1
          %s226 = smul.addr %s225, 256
          %s227 = scalar_lea.vmem [#allocation2], %s226
          %s228 = smul.u32 8, %s19
          %s230 = ssub.s32 4096, 4096
          %231 = vsyncadd %s224, %s230
          %s232 = smul.addr %s228, 128
          %s233 = scalar_lea.hbm %s0, %s232
          %s234 = sshll.u32 %s227, 4
          %s235 = int_to_ptr.vmem [resolvable:$true] %s234
          %240 = dma.hbm_to_vmem [thread:$0]  %s233, 4096, %s235, %s224, 2048, 1024, 64
        $region40: #{tpu_custom_call.1} parent=35 // pred_fallthru
          _
      $region36: #{tpu_custom_call.1} parent=5 // pred_fallthru
        _
      %p241 = scmp.le.s32.totalorder 1, %s19
      %p242 = scmp.lt.s32.totalorder %s19, 3
      %p243 = pnand %p241, %p242
      %p244 = pneg %p243
      // Predicated region
      $region41: #{tpu_custom_call.1} parent=5 // pred_check
        _
      $region42: #{tpu_custom_call.1} parent=5 // pred_check_branch
        %246 = sbr.rel (%p243) target = $region44
      $region43: #{tpu_custom_call.1} parent=5 // pred_region
        %s247 = ssub.s32 %s19, 1
        %s248 = sand.u32 %s32, 1
        %s249 = scalar_lea.sflag [#allocation3], %s248
        %s250 = sand.u32 %s32, 1
        %s251 = smul.addr %s250, 256
        %s252 = scalar_lea.vmem [#allocation2], %s251
        // Predicated region
        $region45: #{tpu_custom_call.1} parent=43 // pred_check
          %p253 = pneg %p45
        $region46: #{tpu_custom_call.1} parent=43 // pred_check_branch
          %255 = sbr.rel (%p253) target = $region48
        $region47: #{tpu_custom_call.1} parent=43 // pred_region
          %256 = dma.done %s249, 4096
        $region48: #{tpu_custom_call.1} parent=43 // pred_fallthru
          _
        // Predicated region
        $region49: #{tpu_custom_call.1} parent=43 // pred_check
          %p257 = pneg %p150
        $region50: #{tpu_custom_call.1} parent=43 // pred_check_branch
          %259 = sbr.rel (%p257) target = $region52
        $region51: #{tpu_custom_call.1} parent=43 // pred_region
          %260 = dma.done [#allocation6], 2048
        $region52: #{tpu_custom_call.1} parent=43 // pred_fallthru
          _
        %s261 = sand.u32 %s32, 1
        %s262 = scalar_lea.sflag [#allocation3], %s261
        %s263 = sand.u32 %s32, 1
        %s264 = smul.addr %s263, 256
        %s265 = scalar_lea.vmem [#allocation2], %s264
        %p266 = pneg %p45
        %p267 = pneg %p42
        %p268 = pneg %p66
        %p269 = pneg %p63
        %p270 = pneg %p87
        %p271 = pneg %p84
        %p272 = pneg %p108
        %p273 = pneg %p105
        %p274 = pneg %p129
        %p275 = pneg %p126
        %p276 = pneg %p150
        %p277 = pneg %p147
        %p278 = pneg %p176
        %p279 = pneg %p173
        %s280 = sand.u32 %s163, 1
        %s281 = scalar_lea.sflag [#allocation4], %s280
        %s282 = sand.u32 %s163, 1
        %s283 = smul.addr %s282, 256
        %s284 = scalar_lea.vmem [#allocation7], %s283
        %s285 = smul.u32 8, %s24
        %s286 = smul.u32 8, %s24
        %v287 = vld [vmem:[%s252] sm:$0xff]
        %v288 = vld [vmem:[%s252 + $0x8] sm:$0xff]
        %v289 = vld [vmem:[%s252 + $0x10] sm:$0xff]
        %v290 = vld [vmem:[%s252 + $0x18] sm:$0xff]
        %v291 = vld [vmem:[%s252 + $0x20] sm:$0xff]
        %v292 = vld [vmem:[%s252 + $0x28] sm:$0xff]
        %v293 = vld [vmem:[%s252 + $0x30] sm:$0xff]
        %v294 = vld [vmem:[%s252 + $0x38] sm:$0xff]
        %v295 = vld [vmem:[%s252 + $0x40] sm:$0xff]
        %v296 = vld [vmem:[%s252 + $0x48] sm:$0xff]
        %v297 = vld [vmem:[%s252 + $0x50] sm:$0xff]
        %v298 = vld [vmem:[%s252 + $0x58] sm:$0xff]
        %v299 = vld [vmem:[%s252 + $0x60] sm:$0xff]
        %v300 = vld [vmem:[%s252 + $0x68] sm:$0xff]
        %v301 = vld [vmem:[%s252 + $0x70] sm:$0xff]
        %v302 = vld [vmem:[%s252 + $0x78] sm:$0xff]
        %v303 = vld [vmem:[%s252 + $0x80] sm:$0xff]
        %v304 = vld [vmem:[%s252 + $0x88] sm:$0xff]
        %v305 = vld [vmem:[%s252 + $0x90] sm:$0xff]
        %v306 = vld [vmem:[%s252 + $0x98] sm:$0xff]
        %v307 = vld [vmem:[%s252 + $0xa0] sm:$0xff]
        %v308 = vld [vmem:[%s252 + $0xa8] sm:$0xff]
        %v309 = vld [vmem:[%s252 + $0xb0] sm:$0xff]
        %v310 = vld [vmem:[%s252 + $0xb8] sm:$0xff]
        %v311 = vld [vmem:[%s252 + $0xc0] sm:$0xff]
        %v312 = vld [vmem:[%s252 + $0xc8] sm:$0xff]
        %v313 = vld [vmem:[%s252 + $0xd0] sm:$0xff]
        %v314 = vld [vmem:[%s252 + $0xd8] sm:$0xff]
        %v315 = vld [vmem:[%s252 + $0xe0] sm:$0xff]
        %v316 = vld [vmem:[%s252 + $0xe8] sm:$0xff]
        %v317 = vld [vmem:[%s252 + $0xf0] sm:$0xff]
        %v318 = vld [vmem:[%s252 + $0xf8] sm:$0xff]
        %v319 = vld [vmem:[%s1] sm:$0xff]
        %v320 = vld [vmem:[%s2] sm:$0xff]
        %322 = vset.pattern.permute.xlu0 0
        %323 = vperm.xlu0 %322, %v320
        %v324 = vpop.permute.xlu0 %323
        %vm326 = vcmask 261120
        %v328 = vsel %vm326, %v319, 0
        %330 = vmatprep.subr.mxu0 %v288
        %331 = vmatpush1.msra.mxu0 %v287
        %332 = vmatprep.subr.mxu0 %v296
        %333 = vmatpush1.msra.mxu0 %v295
        %334 = vmatprep.subr.mxu0 %v304
        %335 = vmatpush1.msra.mxu0 %v303
        %336 = vmatprep.subr.mxu0 %v312
        %337 = vmatpush1.msra.mxu0 %v311
        %338 = vmatprep.subr.mxu0 0.0
        %339 = vmatpush1.msra.mxu0 0.0
        %340 = vmatprep.subr.mxu0 0.0
        %341 = vmatpush1.msra.mxu0 0.0
        %342 = vmatprep.subr.mxu0 0.0
        %343 = vmatpush1.msra.mxu0 0.0
        %344 = vmatprep.subr.mxu0 0.0
        %345 = vmatpush1.msra.mxu0 0.0
        %346 = vmatprep.subr.mxu0 0.0
        %347 = vmatpush1.msra.mxu0 0.0
        %348 = vmatprep.subr.mxu0 0.0
        %349 = vmatpush1.msra.mxu0 0.0
        %350 = vmatprep.subr.mxu0 0.0
        %351 = vmatpush1.msra.mxu0 0.0
        %352 = vmatprep.subr.mxu0 0.0
        %353 = vmatpush1.msra.mxu0 0.0
        %354 = vmatprep.subr.mxu0 0.0
        %355 = vmatpush1.msra.mxu0 0.0
        %356 = vmatprep.subr.mxu0 0.0
        %357 = vmatpush1.msra.mxu0 0.0
        %358 = vmatprep.subr.mxu0 0.0
        %359 = vmatpush1.msra.mxu0 0.0
        %360 = vmatprep.subr.mxu0 0.0
        %361 = vmatpush1.msra.mxu0 0.0
        %362 = vmatprep.subr.mxu0 0.0
        %363 = vmatpush1.msra.mxu0 0.0
        %364 = vmatprep.subr.mxu0 0.0
        %365 = vmatpush1.msra.mxu0 0.0
        %366 = vmatprep.subr.mxu0 0.0
        %367 = vmatpush1.msra.mxu0 0.0
        %368 = vmatprep.subr.mxu0 0.0
        %369 = vmatpush1.msra.mxu0 0.0
        %370 = vmatprep.subr.mxu0 0.0
        %371 = vmatpush1.msra.mxu0 0.0
        %372 = vmatprep.subr.mxu0 0.0
        %373 = vmatpush1.msra.mxu0 0.0
        %374 = vmatprep.subr.mxu0 0.0
        %375 = vmatpush1.msra.mxu0 0.0
        %376 = vmatprep.subr.mxu0 0.0
        %377 = vmatpush1.msra.mxu0 0.0
        %378 = vmatprep.subr.mxu0 0.0
        %379 = vmatpush1.msra.mxu0 0.0
        %380 = vmatprep.subr.mxu0 0.0
        %381 = vmatpush1.msra.mxu0 0.0
        %382 = vmatprep.subr.mxu0 0.0
        %383 = vmatpush1.msra.mxu0 0.0
        %384 = vmatprep.subr.mxu0 0.0
        %385 = vmatpush1.msra.mxu0 0.0
        %386 = vmatprep.subr.mxu0 0.0
        %387 = vmatpush1.msra.mxu0 0.0
        %388 = vmatprep.subr.mxu0 0.0
        %389 = vmatpush1.msra.mxu0 0.0
        %390 = vmatprep.subr.mxu0 0.0
        %391 = vmatpush1.msra.mxu0 0.0
        %392 = vmatprep.subr.mxu0 0.0
        %393 = vmatpush1.msra.mxu0 0.0
        %394 = vmatprep.mubr.f32.mxu0 0.0
        %395 = vmatmul.mubr.f32.gmra.mrb[0].mxu0 %v328
        %v396 = vpop.f32.mrb[0].mxu0
        %v397 = vadd.f32 %v324, %v396
        %v398 = vpop.f32.mrb[0].mxu0
        %v399 = vadd.f32 %v324, %v398
        %400 = vdwg.mxu0
        %401 = vmatprep.subr.mxu0 %v290
        %402 = vmatpush1.msra.mxu0 %v289
        %403 = vmatprep.subr.mxu0 %v298
        %404 = vmatpush1.msra.mxu0 %v297
        %405 = vmatprep.subr.mxu0 %v306
        %406 = vmatpush1.msra.mxu0 %v305
        %407 = vmatprep.subr.mxu0 %v314
        %408 = vmatpush1.msra.mxu0 %v313
        %409 = vmatprep.subr.mxu0 0.0
        %410 = vmatpush1.msra.mxu0 0.0
        %411 = vmatprep.subr.mxu0 0.0
        %412 = vmatpush1.msra.mxu0 0.0
        %413 = vmatprep.subr.mxu0 0.0
        %414 = vmatpush1.msra.mxu0 0.0
        %415 = vmatprep.subr.mxu0 0.0
        %416 = vmatpush1.msra.mxu0 0.0
        %417 = vmatprep.subr.mxu0 0.0
        %418 = vmatpush1.msra.mxu0 0.0
        %419 = vmatprep.subr.mxu0 0.0
        %420 = vmatpush1.msra.mxu0 0.0
        %421 = vmatprep.subr.mxu0 0.0
        %422 = vmatpush1.msra.mxu0 0.0
        %423 = vmatprep.subr.mxu0 0.0
        %424 = vmatpush1.msra.mxu0 0.0
        %425 = vmatprep.subr.mxu0 0.0
        %426 = vmatpush1.msra.mxu0 0.0
        %427 = vmatprep.subr.mxu0 0.0
        %428 = vmatpush1.msra.mxu0 0.0
        %429 = vmatprep.subr.mxu0 0.0
        %430 = vmatpush1.msra.mxu0 0.0
        %431 = vmatprep.subr.mxu0 0.0
        %432 = vmatpush1.msra.mxu0 0.0
        %433 = vmatprep.subr.mxu0 0.0
        %434 = vmatpush1.msra.mxu0 0.0
        %435 = vmatprep.subr.mxu0 0.0
        %436 = vmatpush1.msra.mxu0 0.0
        %437 = vmatprep.subr.mxu0 0.0
        %438 = vmatpush1.msra.mxu0 0.0
        %439 = vmatprep.subr.mxu0 0.0
        %440 = vmatpush1.msra.mxu0 0.0
        %441 = vmatprep.subr.mxu0 0.0
        %442 = vmatpush1.msra.mxu0 0.0
        %443 = vmatprep.subr.mxu0 0.0
        %444 = vmatpush1.msra.mxu0 0.0
        %445 = vmatprep.subr.mxu0 0.0
        %446 = vmatpush1.msra.mxu0 0.0
        %447 = vmatprep.subr.mxu0 0.0
        %448 = vmatpush1.msra.mxu0 0.0
        %449 = vmatprep.subr.mxu0 0.0
        %450 = vmatpush1.msra.mxu0 0.0
        %451 = vmatprep.subr.mxu0 0.0
        %452 = vmatpush1.msra.mxu0 0.0
        %453 = vmatprep.subr.mxu0 0.0
        %454 = vmatpush1.msra.mxu0 0.0
        %455 = vmatprep.subr.mxu0 0.0
        %456 = vmatpush1.msra.mxu0 0.0
        %457 = vmatprep.subr.mxu0 0.0
        %458 = vmatpush1.msra.mxu0 0.0
        %459 = vmatprep.subr.mxu0 0.0
        %460 = vmatpush1.msra.mxu0 0.0
        %461 = vmatprep.subr.mxu0 0.0
        %462 = vmatpush1.msra.mxu0 0.0
        %463 = vmatprep.subr.mxu0 0.0
        %464 = vmatpush1.msra.mxu0 0.0
        %465 = vmatprep.mubr.f32.mxu0 0.0
        %466 = vmatmul.mubr.f32.gmra.mrb[0].mxu0 %v328
        %v467 = vpop.f32.mrb[0].mxu0
        %v468 = vadd.f32 %v324, %v467
        %v469 = vpop.f32.mrb[0].mxu0
        %v470 = vadd.f32 %v324, %v469
        %471 = vdwg.mxu0
        %472 = vmatprep.subr.mxu0 %v292
        %473 = vmatpush1.msra.mxu0 %v291
        %474 = vmatprep.subr.mxu0 %v300
        %475 = vmatpush1.msra.mxu0 %v299
        %476 = vmatprep.subr.mxu0 %v308
        %477 = vmatpush1.msra.mxu0 %v307
        %478 = vmatprep.subr.mxu0 %v316
        %479 = vmatpush1.msra.mxu0 %v315
        %480 = vmatprep.subr.mxu0 0.0
        %481 = vmatpush1.msra.mxu0 0.0
        %482 = vmatprep.subr.mxu0 0.0
        %483 = vmatpush1.msra.mxu0 0.0
        %484 = vmatprep.subr.mxu0 0.0
        %485 = vmatpush1.msra.mxu0 0.0
        %486 = vmatprep.subr.mxu0 0.0
        %487 = vmatpush1.msra.mxu0 0.0
        %488 = vmatprep.subr.mxu0 0.0
        %489 = vmatpush1.msra.mxu0 0.0
        %490 = vmatprep.subr.mxu0 0.0
        %491 = vmatpush1.msra.mxu0 0.0
        %492 = vmatprep.subr.mxu0 0.0
        %493 = vmatpush1.msra.mxu0 0.0
        %494 = vmatprep.subr.mxu0 0.0
        %495 = vmatpush1.msra.mxu0 0.0
        %496 = vmatprep.subr.mxu0 0.0
        %497 = vmatpush1.msra.mxu0 0.0
        %498 = vmatprep.subr.mxu0 0.0
        %499 = vmatpush1.msra.mxu0 0.0
        %500 = vmatprep.subr.mxu0 0.0
        %501 = vmatpush1.msra.mxu0 0.0
        %502 = vmatprep.subr.mxu0 0.0
        %503 = vmatpush1.msra.mxu0 0.0
        %504 = vmatprep.subr.mxu0 0.0
        %505 = vmatpush1.msra.mxu0 0.0
        %506 = vmatprep.subr.mxu0 0.0
        %507 = vmatpush1.msra.mxu0 0.0
        %508 = vmatprep.subr.mxu0 0.0
        %509 = vmatpush1.msra.mxu0 0.0
        %510 = vmatprep.subr.mxu0 0.0
        %511 = vmatpush1.msra.mxu0 0.0
        %512 = vmatprep.subr.mxu0 0.0
        %513 = vmatpush1.msra.mxu0 0.0
        %514 = vmatprep.subr.mxu0 0.0
        %515 = vmatpush1.msra.mxu0 0.0
        %516 = vmatprep.subr.mxu0 0.0
        %517 = vmatpush1.msra.mxu0 0.0
        %518 = vmatprep.subr.mxu0 0.0
        %519 = vmatpush1.msra.mxu0 0.0
        %520 = vmatprep.subr.mxu0 0.0
        %521 = vmatpush1.msra.mxu0 0.0
        %522 = vmatprep.subr.mxu0 0.0
        %523 = vmatpush1.msra.mxu0 0.0
        %524 = vmatprep.subr.mxu0 0.0
        %525 = vmatpush1.msra.mxu0 0.0
        %526 = vmatprep.subr.mxu0 0.0
        %527 = vmatpush1.msra.mxu0 0.0
        %528 = vmatprep.subr.mxu0 0.0
        %529 = vmatpush1.msra.mxu0 0.0
        %530 = vmatprep.subr.mxu0 0.0
        %531 = vmatpush1.msra.mxu0 0.0
        %532 = vmatprep.subr.mxu0 0.0
        %533 = vmatpush1.msra.mxu0 0.0
        %534 = vmatprep.subr.mxu0 0.0
        %535 = vmatpush1.msra.mxu0 0.0
        %536 = vmatprep.mubr.f32.mxu0 0.0
        %537 = vmatmul.mubr.f32.gmra.mrb[0].mxu0 %v328
        %v538 = vpop.f32.mrb[0].mxu0
        %v539 = vadd.f32 %v324, %v538
        %v540 = vpop.f32.mrb[0].mxu0
        %v541 = vadd.f32 %v324, %v540
        %542 = vdwg.mxu0
        %543 = vmatprep.subr.mxu0 %v294
        %544 = vmatpush1.msra.mxu0 %v293
        %545 = vmatprep.subr.mxu0 %v302
        %546 = vmatpush1.msra.mxu0 %v301
        %547 = vmatprep.subr.mxu0 %v310
        %548 = vmatpush1.msra.mxu0 %v309
        %549 = vmatprep.subr.mxu0 %v318
        %550 = vmatpush1.msra.mxu0 %v317
        %551 = vmatprep.subr.mxu0 0.0
        %552 = vmatpush1.msra.mxu0 0.0
        %553 = vmatprep.subr.mxu0 0.0
        %554 = vmatpush1.msra.mxu0 0.0
        %555 = vmatprep.subr.mxu0 0.0
        %556 = vmatpush1.msra.mxu0 0.0
        %557 = vmatprep.subr.mxu0 0.0
        %558 = vmatpush1.msra.mxu0 0.0
        %559 = vmatprep.subr.mxu0 0.0
        %560 = vmatpush1.msra.mxu0 0.0
        %561 = vmatprep.subr.mxu0 0.0
        %562 = vmatpush1.msra.mxu0 0.0
        %563 = vmatprep.subr.mxu0 0.0
        %564 = vmatpush1.msra.mxu0 0.0
        %565 = vmatprep.subr.mxu0 0.0
        %566 = vmatpush1.msra.mxu0 0.0
        %567 = vmatprep.subr.mxu0 0.0
        %568 = vmatpush1.msra.mxu0 0.0
        %569 = vmatprep.subr.mxu0 0.0
        %570 = vmatpush1.msra.mxu0 0.0
        %571 = vmatprep.subr.mxu0 0.0
        %572 = vmatpush1.msra.mxu0 0.0
        %573 = vmatprep.subr.mxu0 0.0
        %574 = vmatpush1.msra.mxu0 0.0
        %575 = vmatprep.subr.mxu0 0.0
        %576 = vmatpush1.msra.mxu0 0.0
        %577 = vmatprep.subr.mxu0 0.0
        %578 = vmatpush1.msra.mxu0 0.0
        %579 = vmatprep.subr.mxu0 0.0
        %580 = vmatpush1.msra.mxu0 0.0
        %581 = vmatprep.subr.mxu0 0.0
        %582 = vmatpush1.msra.mxu0 0.0
        %583 = vmatprep.subr.mxu0 0.0
        %584 = vmatpush1.msra.mxu0 0.0
        %585 = vmatprep.subr.mxu0 0.0
        %586 = vmatpush1.msra.mxu0 0.0
        %587 = vmatprep.subr.mxu0 0.0
        %588 = vmatpush1.msra.mxu0 0.0
        %589 = vmatprep.subr.mxu0 0.0
        %590 = vmatpush1.msra.mxu0 0.0
        %591 = vmatprep.subr.mxu0 0.0
        %592 = vmatpush1.msra.mxu0 0.0
        %593 = vmatprep.subr.mxu0 0.0
        %594 = vmatpush1.msra.mxu0 0.0
        %595 = vmatprep.subr.mxu0 0.0
        %596 = vmatpush1.msra.mxu0 0.0
        %597 = vmatprep.subr.mxu0 0.0
        %598 = vmatpush1.msra.mxu0 0.0
        %599 = vmatprep.subr.mxu0 0.0
        %600 = vmatpush1.msra.mxu0 0.0
        %601 = vmatprep.subr.mxu0 0.0
        %602 = vmatpush1.msra.mxu0 0.0
        %603 = vmatprep.subr.mxu0 0.0
        %604 = vmatpush1.msra.mxu0 0.0
        %605 = vmatprep.subr.mxu0 0.0
        %606 = vmatpush1.msra.mxu0 0.0
        %607 = vmatprep.mubr.f32.mxu0 0.0
        %608 = vmatmul.mubr.f32.gmra.mrb[0].mxu0 %v328
        %v609 = vpop.f32.mrb[0].mxu0
        %v610 = vadd.f32 %v324, %v609
        %v611 = vpop.f32.mrb[0].mxu0
        %v612 = vadd.f32 %v324, %v611
        %613 = vdwg.mxu0
        %v614 = vmax.f32 %v397, 0.0
        %v615 = vmax.f32 %v399, 0.0
        %v616 = vmax.f32 %v468, 0.0
        %v617 = vmax.f32 %v470, 0.0
        %v618 = vmax.f32 %v539, 0.0
        %v619 = vmax.f32 %v541, 0.0
        %v620 = vmax.f32 %v610, 0.0
        %v621 = vmax.f32 %v612, 0.0
        %v622 = vld [vmem:[#allocation5] sm:$0xff]
        %v623 = vld [vmem:[#allocation5 + $0x8] sm:$0xff]
        %v624 = vld [vmem:[#allocation5 + $0x10] sm:$0xff]
        %v625 = vld [vmem:[#allocation5 + $0x18] sm:$0xff]
        %v626 = vld [vmem:[#allocation5 + $0x20] sm:$0xff]
        %v627 = vld [vmem:[#allocation5 + $0x28] sm:$0xff]
        %v628 = vld [vmem:[#allocation5 + $0x30] sm:$0xff]
        %v629 = vld [vmem:[#allocation5 + $0x38] sm:$0xff]
        %v630 = vld [vmem:[#allocation5 + $0x40] sm:$0x1]
        %v631 = vld [vmem:[#allocation5 + $0x48] sm:$0x1]
        %v632 = vld [vmem:[#allocation5 + $0x50] sm:$0x1]
        %v633 = vld [vmem:[#allocation5 + $0x58] sm:$0x1]
        %v634 = vld [vmem:[#allocation5 + $0x60] sm:$0x1]
        %v635 = vld [vmem:[#allocation5 + $0x68] sm:$0x1]
        %v636 = vld [vmem:[#allocation5 + $0x70] sm:$0x1]
        %v637 = vld [vmem:[#allocation5 + $0x78] sm:$0x1]
        %638 = vrot.lane.b32.xlu0 %v614, 17
        %v639 = vpop.permute.xlu0 %638
        %640 = vrot.lane.b32.xlu0 %v615, 17
        %v641 = vpop.permute.xlu0 %640
        %642 = vrot.lane.b32.xlu0 %v616, 17
        %v643 = vpop.permute.xlu0 %642
        %644 = vrot.lane.b32.xlu0 %v617, 17
        %v645 = vpop.permute.xlu0 %644
        %646 = vrot.lane.b32.xlu0 %v618, 17
        %v647 = vpop.permute.xlu0 %646
        %648 = vrot.lane.b32.xlu0 %v619, 17
        %v649 = vpop.permute.xlu0 %648
        %650 = vrot.lane.b32.xlu0 %v620, 17
        %v651 = vpop.permute.xlu0 %650
        %652 = vrot.lane.b32.xlu0 %v621, 17
        %v653 = vpop.permute.xlu0 %652
        %v654 = vlaneseq
        %v655 = vand.u32 %v654, 127
        %vm656 = vcmp.lt.s32.totalorder %v655, 17
        %v657 = vsel %vm656, %v651, %v653
        %v658 = vsel %vm656, %v649, %v651
        %v659 = vsel %vm656, %v647, %v649
        %v660 = vsel %vm656, %v645, %v647
        %v661 = vsel %vm656, %v643, %v645
        %v662 = vsel %vm656, %v641, %v643
        %v663 = vsel %vm656, %v639, %v641
        %v664 = vsel %vm656, %v653, %v639
        %v665 = vlaneseq
        %v666 = vshrl.u32 %v665, 7
        %v667 = vsub.s32 0, %v666
        %v668 = vrot.slane %v622, %v667
        %v669 = vlaneseq
        %v670 = vshrl.u32 %v669, 7
        %v671 = vsub.s32 0, %v670
        %v672 = vrot.slane %v623, %v671
        %v673 = vlaneseq
        %v674 = vshrl.u32 %v673, 7
        %v675 = vsub.s32 0, %v674
        %v676 = vrot.slane %v624, %v675
        %v677 = vlaneseq
        %v678 = vshrl.u32 %v677, 7
        %v679 = vsub.s32 0, %v678
        %v680 = vrot.slane %v625, %v679
        %v681 = vlaneseq
        %v682 = vshrl.u32 %v681, 7
        %v683 = vsub.s32 0, %v682
        %v684 = vrot.slane %v626, %v683
        %v685 = vlaneseq
        %v686 = vshrl.u32 %v685, 7
        %v687 = vsub.s32 0, %v686
        %v688 = vrot.slane %v627, %v687
        %v689 = vlaneseq
        %v690 = vshrl.u32 %v689, 7
        %v691 = vsub.s32 0, %v690
        %v692 = vrot.slane %v628, %v691
        %v693 = vlaneseq
        %v694 = vshrl.u32 %v693, 7
        %v695 = vsub.s32 0, %v694
        %v696 = vrot.slane %v629, %v695
        %v697 = vmul.f32 %v664, %v668
        %v698 = vmul.f32 %v663, %v672
        %v699 = vmul.f32 %v662, %v676
        %v700 = vmul.f32 %v661, %v680
        %v701 = vmul.f32 %v660, %v684
        %v702 = vmul.f32 %v659, %v688
        %v703 = vmul.f32 %v658, %v692
        %v704 = vmul.f32 %v657, %v696
        %705 = vrot.lane.b32.xlu0 %v614, 16
        %v706 = vpop.permute.xlu0 %705
        %707 = vrot.lane.b32.xlu0 %v615, 16
        %v708 = vpop.permute.xlu0 %707
        %709 = vrot.lane.b32.xlu0 %v616, 16
        %v710 = vpop.permute.xlu0 %709
        %711 = vrot.lane.b32.xlu0 %v617, 16
        %v712 = vpop.permute.xlu0 %711
        %713 = vrot.lane.b32.xlu0 %v618, 16
        %v714 = vpop.permute.xlu0 %713
        %715 = vrot.lane.b32.xlu0 %v619, 16
        %v716 = vpop.permute.xlu0 %715
        %717 = vrot.lane.b32.xlu0 %v620, 16
        %v718 = vpop.permute.xlu0 %717
        %719 = vrot.lane.b32.xlu0 %v621, 16
        %v720 = vpop.permute.xlu0 %719
        %vm721 = vcmp.lt.s32.totalorder %v655, 16
        %v722 = vsel %vm721, %v718, %v720
        %v723 = vsel %vm721, %v716, %v718
        %v724 = vsel %vm721, %v714, %v716
        %v725 = vsel %vm721, %v712, %v714
        %v726 = vsel %vm721, %v710, %v712
        %v727 = vsel %vm721, %v708, %v710
        %v728 = vsel %vm721, %v706, %v708
        %v729 = vsel %vm721, %v720, %v706
        %v730 = vlaneseq
        %v731 = vshrl.u32 %v730, 7
        %v732 = vsub.s32 1, %v731
        %v733 = vrot.slane %v622, %v732
        %v734 = vlaneseq
        %v735 = vshrl.u32 %v734, 7
        %v736 = vsub.s32 1, %v735
        %v737 = vrot.slane %v623, %v736
        %v738 = vlaneseq
        %v739 = vshrl.u32 %v738, 7
        %v740 = vsub.s32 1, %v739
        %v741 = vrot.slane %v624, %v740
        %v742 = vlaneseq
        %v743 = vshrl.u32 %v742, 7
        %v744 = vsub.s32 1, %v743
        %v745 = vrot.slane %v625, %v744
        %v746 = vlaneseq
        %v747 = vshrl.u32 %v746, 7
        %v748 = vsub.s32 1, %v747
        %v749 = vrot.slane %v626, %v748
        %v750 = vlaneseq
        %v751 = vshrl.u32 %v750, 7
        %v752 = vsub.s32 1, %v751
        %v753 = vrot.slane %v627, %v752
        %v754 = vlaneseq
        %v755 = vshrl.u32 %v754, 7
        %v756 = vsub.s32 1, %v755
        %v757 = vrot.slane %v628, %v756
        %v758 = vlaneseq
        %v759 = vshrl.u32 %v758, 7
        %v760 = vsub.s32 1, %v759
        %v761 = vrot.slane %v629, %v760
        %v762 = vmul.f32 %v729, %v733
        %v763 = vmul.f32 %v728, %v737
        %v764 = vmul.f32 %v727, %v741
        %v765 = vmul.f32 %v726, %v745
        %v766 = vmul.f32 %v725, %v749
        %v767 = vmul.f32 %v724, %v753
        %v768 = vmul.f32 %v723, %v757
        %v769 = vmul.f32 %v722, %v761
        %770 = vrot.lane.b32.xlu0 %v614, 15
        %v771 = vpop.permute.xlu0 %770
        %772 = vrot.lane.b32.xlu0 %v615, 15
        %v773 = vpop.permute.xlu0 %772
        %774 = vrot.lane.b32.xlu0 %v616, 15
        %v775 = vpop.permute.xlu0 %774
        %776 = vrot.lane.b32.xlu0 %v617, 15
        %v777 = vpop.permute.xlu0 %776
        %778 = vrot.lane.b32.xlu0 %v618, 15
        %v779 = vpop.permute.xlu0 %778
        %780 = vrot.lane.b32.xlu0 %v619, 15
        %v781 = vpop.permute.xlu0 %780
        %782 = vrot.lane.b32.xlu0 %v620, 15
        %v783 = vpop.permute.xlu0 %782
        %784 = vrot.lane.b32.xlu0 %v621, 15
        %v785 = vpop.permute.xlu0 %784
        %vm786 = vcmp.lt.s32.totalorder %v655, 15
        %v787 = vsel %vm786, %v783, %v785
        %v788 = vsel %vm786, %v781, %v783
        %v789 = vsel %vm786, %v779, %v781
        %v790 = vsel %vm786, %v777, %v779
        %v791 = vsel %vm786, %v775, %v777
        %v792 = vsel %vm786, %v773, %v775
        %v793 = vsel %vm786, %v771, %v773
        %v794 = vsel %vm786, %v785, %v771
        %v795 = vlaneseq
        %v796 = vshrl.u32 %v795, 7
        %v797 = vsub.s32 2, %v796
        %v798 = vrot.slane %v622, %v797
        %v799 = vlaneseq
        %v800 = vshrl.u32 %v799, 7
        %v801 = vsub.s32 2, %v800
        %v802 = vrot.slane %v623, %v801
        %v803 = vlaneseq
        %v804 = vshrl.u32 %v803, 7
        %v805 = vsub.s32 2, %v804
        %v806 = vrot.slane %v624, %v805
        %v807 = vlaneseq
        %v808 = vshrl.u32 %v807, 7
        %v809 = vsub.s32 2, %v808
        %v810 = vrot.slane %v625, %v809
        %v811 = vlaneseq
        %v812 = vshrl.u32 %v811, 7
        %v813 = vsub.s32 2, %v812
        %v814 = vrot.slane %v626, %v813
        %v815 = vlaneseq
        %v816 = vshrl.u32 %v815, 7
        %v817 = vsub.s32 2, %v816
        %v818 = vrot.slane %v627, %v817
        %v819 = vlaneseq
        %v820 = vshrl.u32 %v819, 7
        %v821 = vsub.s32 2, %v820
        %v822 = vrot.slane %v628, %v821
        %v823 = vlaneseq
        %v824 = vshrl.u32 %v823, 7
        %v825 = vsub.s32 2, %v824
        %v826 = vrot.slane %v629, %v825
        %v827 = vmul.f32 %v794, %v798
        %v828 = vmul.f32 %v793, %v802
        %v829 = vmul.f32 %v792, %v806
        %v830 = vmul.f32 %v791, %v810
        %v831 = vmul.f32 %v790, %v814
        %v832 = vmul.f32 %v789, %v818
        %v833 = vmul.f32 %v788, %v822
        %v834 = vmul.f32 %v787, %v826
        %835 = vrot.lane.b32.xlu0 %v614, 1
        %v836 = vpop.permute.xlu0 %835
        %837 = vrot.lane.b32.xlu0 %v615, 1
        %v838 = vpop.permute.xlu0 %837
        %839 = vrot.lane.b32.xlu0 %v616, 1
        %v840 = vpop.permute.xlu0 %839
        %841 = vrot.lane.b32.xlu0 %v617, 1
        %v842 = vpop.permute.xlu0 %841
        %843 = vrot.lane.b32.xlu0 %v618, 1
        %v844 = vpop.permute.xlu0 %843
        %845 = vrot.lane.b32.xlu0 %v619, 1
        %v846 = vpop.permute.xlu0 %845
        %847 = vrot.lane.b32.xlu0 %v620, 1
        %v848 = vpop.permute.xlu0 %847
        %849 = vrot.lane.b32.xlu0 %v621, 1
        %v850 = vpop.permute.xlu0 %849
        %vm851 = vcmp.lt.s32.totalorder %v655, 1
        %v852 = vsel %vm851, %v848, %v850
        %v853 = vsel %vm851, %v846, %v848
        %v854 = vsel %vm851, %v844, %v846
        %v855 = vsel %vm851, %v842, %v844
        %v856 = vsel %vm851, %v840, %v842
        %v857 = vsel %vm851, %v838, %v840
        %v858 = vsel %vm851, %v836, %v838
        %v859 = vsel %vm851, %v850, %v836
        %v860 = vlaneseq
        %v861 = vshrl.u32 %v860, 7
        %v862 = vsub.s32 3, %v861
        %v863 = vrot.slane %v622, %v862
        %v864 = vlaneseq
        %v865 = vshrl.u32 %v864, 7
        %v866 = vsub.s32 3, %v865
        %v867 = vrot.slane %v623, %v866
        %v868 = vlaneseq
        %v869 = vshrl.u32 %v868, 7
        %v870 = vsub.s32 3, %v869
        %v871 = vrot.slane %v624, %v870
        %v872 = vlaneseq
        %v873 = vshrl.u32 %v872, 7
        %v874 = vsub.s32 3, %v873
        %v875 = vrot.slane %v625, %v874
        %v876 = vlaneseq
        %v877 = vshrl.u32 %v876, 7
        %v878 = vsub.s32 3, %v877
        %v879 = vrot.slane %v626, %v878
        %v880 = vlaneseq
        %v881 = vshrl.u32 %v880, 7
        %v882 = vsub.s32 3, %v881
        %v883 = vrot.slane %v627, %v882
        %v884 = vlaneseq
        %v885 = vshrl.u32 %v884, 7
        %v886 = vsub.s32 3, %v885
        %v887 = vrot.slane %v628, %v886
        %v888 = vlaneseq
        %v889 = vshrl.u32 %v888, 7
        %v890 = vsub.s32 3, %v889
        %v891 = vrot.slane %v629, %v890
        %v892 = vmul.f32 %v859, %v863
        %v893 = vmul.f32 %v858, %v867
        %v894 = vmul.f32 %v857, %v871
        %v895 = vmul.f32 %v856, %v875
        %v896 = vmul.f32 %v855, %v879
        %v897 = vmul.f32 %v854, %v883
        %v898 = vmul.f32 %v853, %v887
        %v899 = vmul.f32 %v852, %v891
        %v900 = vlaneseq
        %v901 = vshrl.u32 %v900, 7
        %v902 = vsub.s32 4, %v901
        %v903 = vrot.slane %v622, %v902
        %v904 = vlaneseq
        %v905 = vshrl.u32 %v904, 7
        %v906 = vsub.s32 4, %v905
        %v907 = vrot.slane %v623, %v906
        %v908 = vlaneseq
        %v909 = vshrl.u32 %v908, 7
        %v910 = vsub.s32 4, %v909
        %v911 = vrot.slane %v624, %v910
        %v912 = vlaneseq
        %v913 = vshrl.u32 %v912, 7
        %v914 = vsub.s32 4, %v913
        %v915 = vrot.slane %v625, %v914
        %v916 = vlaneseq
        %v917 = vshrl.u32 %v916, 7
        %v918 = vsub.s32 4, %v917
        %v919 = vrot.slane %v626, %v918
        %v920 = vlaneseq
        %v921 = vshrl.u32 %v920, 7
        %v922 = vsub.s32 4, %v921
        %v923 = vrot.slane %v627, %v922
        %v924 = vlaneseq
        %v925 = vshrl.u32 %v924, 7
        %v926 = vsub.s32 4, %v925
        %v927 = vrot.slane %v628, %v926
        %v928 = vlaneseq
        %v929 = vshrl.u32 %v928, 7
        %v930 = vsub.s32 4, %v929
        %v931 = vrot.slane %v629, %v930
        %v932 = vmul.f32 %v614, %v903
        %v933 = vmul.f32 %v615, %v907
        %v934 = vmul.f32 %v616, %v911
        %v935 = vmul.f32 %v617, %v915
        %v936 = vmul.f32 %v618, %v919
        %v937 = vmul.f32 %v619, %v923
        %v938 = vmul.f32 %v620, %v927
        %v939 = vmul.f32 %v621, %v931
        %940 = vrot.lane.b32.xlu0 %v614, 127
        %v941 = vpop.permute.xlu0 %940
        %942 = vrot.lane.b32.xlu0 %v615, 127
        %v943 = vpop.permute.xlu0 %942
        %944 = vrot.lane.b32.xlu0 %v616, 127
        %v945 = vpop.permute.xlu0 %944
        %946 = vrot.lane.b32.xlu0 %v617, 127
        %v947 = vpop.permute.xlu0 %946
        %948 = vrot.lane.b32.xlu0 %v618, 127
        %v949 = vpop.permute.xlu0 %948
        %950 = vrot.lane.b32.xlu0 %v619, 127
        %v951 = vpop.permute.xlu0 %950
        %952 = vrot.lane.b32.xlu0 %v620, 127
        %v953 = vpop.permute.xlu0 %952
        %954 = vrot.lane.b32.xlu0 %v621, 127
        %v955 = vpop.permute.xlu0 %954
        %vm956 = vcmp.lt.s32.totalorder %v655, 127
        %v957 = vsel %vm956, %v953, %v955
        %v958 = vsel %vm956, %v951, %v953
        %v959 = vsel %vm956, %v949, %v951
        %v960 = vsel %vm956, %v947, %v949
        %v961 = vsel %vm956, %v945, %v947
        %v962 = vsel %vm956, %v943, %v945
        %v963 = vsel %vm956, %v941, %v943
        %v964 = vsel %vm956, %v955, %v941
        %v965 = vlaneseq
        %v966 = vshrl.u32 %v965, 7
        %v967 = vsub.s32 5, %v966
        %v968 = vrot.slane %v622, %v967
        %v969 = vlaneseq
        %v970 = vshrl.u32 %v969, 7
        %v971 = vsub.s32 5, %v970
        %v972 = vrot.slane %v623, %v971
        %v973 = vlaneseq
        %v974 = vshrl.u32 %v973, 7
        %v975 = vsub.s32 5, %v974
        %v976 = vrot.slane %v624, %v975
        %v977 = vlaneseq
        %v978 = vshrl.u32 %v977, 7
        %v979 = vsub.s32 5, %v978
        %v980 = vrot.slane %v625, %v979
        %v981 = vlaneseq
        %v982 = vshrl.u32 %v981, 7
        %v983 = vsub.s32 5, %v982
        %v984 = vrot.slane %v626, %v983
        %v985 = vlaneseq
        %v986 = vshrl.u32 %v985, 7
        %v987 = vsub.s32 5, %v986
        %v988 = vrot.slane %v627, %v987
        %v989 = vlaneseq
        %v990 = vshrl.u32 %v989, 7
        %v991 = vsub.s32 5, %v990
        %v992 = vrot.slane %v628, %v991
        %v993 = vlaneseq
        %v994 = vshrl.u32 %v993, 7
        %v995 = vsub.s32 5, %v994
        %v996 = vrot.slane %v629, %v995
        %v997 = vmul.f32 %v963, %v968
        %v998 = vmul.f32 %v962, %v972
        %v999 = vmul.f32 %v961, %v976
        %v1000 = vmul.f32 %v960, %v980
        %v1001 = vmul.f32 %v959, %v984
        %v1002 = vmul.f32 %v958, %v988
        %v1003 = vmul.f32 %v957, %v992
        %v1004 = vmul.f32 %v964, %v996
        %1005 = vrot.lane.b32.xlu0 %v614, 113
        %v1006 = vpop.permute.xlu0 %1005
        %1007 = vrot.lane.b32.xlu0 %v615, 113
        %v1008 = vpop.permute.xlu0 %1007
        %1009 = vrot.lane.b32.xlu0 %v616, 113
        %v1010 = vpop.permute.xlu0 %1009
        %1011 = vrot.lane.b32.xlu0 %v617, 113
        %v1012 = vpop.permute.xlu0 %1011
        %1013 = vrot.lane.b32.xlu0 %v618, 113
        %v1014 = vpop.permute.xlu0 %1013
        %1015 = vrot.lane.b32.xlu0 %v619, 113
        %v1016 = vpop.permute.xlu0 %1015
        %1017 = vrot.lane.b32.xlu0 %v620, 113
        %v1018 = vpop.permute.xlu0 %1017
        %1019 = vrot.lane.b32.xlu0 %v621, 113
        %v1020 = vpop.permute.xlu0 %1019
        %vm1021 = vcmp.lt.s32.totalorder %v655, 113
        %v1022 = vsel %vm1021, %v1018, %v1020
        %v1023 = vsel %vm1021, %v1016, %v1018
        %v1024 = vsel %vm1021, %v1014, %v1016
        %v1025 = vsel %vm1021, %v1012, %v1014
        %v1026 = vsel %vm1021, %v1010, %v1012
        %v1027 = vsel %vm1021, %v1008, %v1010
        %v1028 = vsel %vm1021, %v1006, %v1008
        %v1029 = vsel %vm1021, %v1020, %v1006
        %v1030 = vlaneseq
        %v1031 = vshrl.u32 %v1030, 7
        %v1032 = vsub.s32 6, %v1031
        %v1033 = vrot.slane %v622, %v1032
        %v1034 = vlaneseq
        %v1035 = vshrl.u32 %v1034, 7
        %v1036 = vsub.s32 6, %v1035
        %v1037 = vrot.slane %v623, %v1036
        %v1038 = vlaneseq
        %v1039 = vshrl.u32 %v1038, 7
        %v1040 = vsub.s32 6, %v1039
        %v1041 = vrot.slane %v624, %v1040
        %v1042 = vlaneseq
        %v1043 = vshrl.u32 %v1042, 7
        %v1044 = vsub.s32 6, %v1043
        %v1045 = vrot.slane %v625, %v1044
        %v1046 = vlaneseq
        %v1047 = vshrl.u32 %v1046, 7
        %v1048 = vsub.s32 6, %v1047
        %v1049 = vrot.slane %v626, %v1048
        %v1050 = vlaneseq
        %v1051 = vshrl.u32 %v1050, 7
        %v1052 = vsub.s32 6, %v1051
        %v1053 = vrot.slane %v627, %v1052
        %v1054 = vlaneseq
        %v1055 = vshrl.u32 %v1054, 7
        %v1056 = vsub.s32 6, %v1055
        %v1057 = vrot.slane %v628, %v1056
        %v1058 = vlaneseq
        %v1059 = vshrl.u32 %v1058, 7
        %v1060 = vsub.s32 6, %v1059
        %v1061 = vrot.slane %v629, %v1060
        %v1062 = vmul.f32 %v1028, %v1033
        %v1063 = vmul.f32 %v1027, %v1037
        %v1064 = vmul.f32 %v1026, %v1041
        %v1065 = vmul.f32 %v1025, %v1045
        %v1066 = vmul.f32 %v1024, %v1049
        %v1067 = vmul.f32 %v1023, %v1053
        %v1068 = vmul.f32 %v1022, %v1057
        %v1069 = vmul.f32 %v1029, %v1061
        %1070 = vrot.lane.b32.xlu0 %v614, 112
        %v1071 = vpop.permute.xlu0 %1070
        %1072 = vrot.lane.b32.xlu0 %v615, 112
        %v1073 = vpop.permute.xlu0 %1072
        %1074 = vrot.lane.b32.xlu0 %v616, 112
        %v1075 = vpop.permute.xlu0 %1074
        %1076 = vrot.lane.b32.xlu0 %v617, 112
        %v1077 = vpop.permute.xlu0 %1076
        %1078 = vrot.lane.b32.xlu0 %v618, 112
        %v1079 = vpop.permute.xlu0 %1078
        %1080 = vrot.lane.b32.xlu0 %v619, 112
        %v1081 = vpop.permute.xlu0 %1080
        %1082 = vrot.lane.b32.xlu0 %v620, 112
        %v1083 = vpop.permute.xlu0 %1082
        %1084 = vrot.lane.b32.xlu0 %v621, 112
        %v1085 = vpop.permute.xlu0 %1084
        %vm1086 = vcmp.lt.s32.totalorder %v655, 112
        %v1087 = vsel %vm1086, %v1083, %v1085
        %v1088 = vsel %vm1086, %v1081, %v1083
        %v1089 = vsel %vm1086, %v1079, %v1081
        %v1090 = vsel %vm1086, %v1077, %v1079
        %v1091 = vsel %vm1086, %v1075, %v1077
        %v1092 = vsel %vm1086, %v1073, %v1075
        %v1093 = vsel %vm1086, %v1071, %v1073
        %v1094 = vsel %vm1086, %v1085, %v1071
        %v1095 = vlaneseq
        %v1096 = vshrl.u32 %v1095, 7
        %v1097 = vsub.s32 7, %v1096
        %v1098 = vrot.slane %v622, %v1097
        %v1099 = vlaneseq
        %v1100 = vshrl.u32 %v1099, 7
        %v1101 = vsub.s32 7, %v1100
        %v1102 = vrot.slane %v623, %v1101
        %v1103 = vlaneseq
        %v1104 = vshrl.u32 %v1103, 7
        %v1105 = vsub.s32 7, %v1104
        %v1106 = vrot.slane %v624, %v1105
        %v1107 = vlaneseq
        %v1108 = vshrl.u32 %v1107, 7
        %v1109 = vsub.s32 7, %v1108
        %v1110 = vrot.slane %v625, %v1109
        %v1111 = vlaneseq
        %v1112 = vshrl.u32 %v1111, 7
        %v1113 = vsub.s32 7, %v1112
        %v1114 = vrot.slane %v626, %v1113
        %v1115 = vlaneseq
        %v1116 = vshrl.u32 %v1115, 7
        %v1117 = vsub.s32 7, %v1116
        %v1118 = vrot.slane %v627, %v1117
        %v1119 = vlaneseq
        %v1120 = vshrl.u32 %v1119, 7
        %v1121 = vsub.s32 7, %v1120
        %v1122 = vrot.slane %v628, %v1121
        %v1123 = vlaneseq
        %v1124 = vshrl.u32 %v1123, 7
        %v1125 = vsub.s32 7, %v1124
        %v1126 = vrot.slane %v629, %v1125
        %v1127 = vmul.f32 %v1093, %v1098
        %v1128 = vmul.f32 %v1092, %v1102
        %v1129 = vmul.f32 %v1091, %v1106
        %v1130 = vmul.f32 %v1090, %v1110
        %v1131 = vmul.f32 %v1089, %v1114
        %v1132 = vmul.f32 %v1088, %v1118
        %v1133 = vmul.f32 %v1087, %v1122
        %v1134 = vmul.f32 %v1094, %v1126
        %1135 = vrot.lane.b32.xlu0 %v614, 111
        %v1136 = vpop.permute.xlu0 %1135
        %1137 = vrot.lane.b32.xlu0 %v615, 111
        %v1138 = vpop.permute.xlu0 %1137
        %1139 = vrot.lane.b32.xlu0 %v616, 111
        %v1140 = vpop.permute.xlu0 %1139
        %1141 = vrot.lane.b32.xlu0 %v617, 111
        %v1142 = vpop.permute.xlu0 %1141
        %1143 = vrot.lane.b32.xlu0 %v618, 111
        %v1144 = vpop.permute.xlu0 %1143
        %1145 = vrot.lane.b32.xlu0 %v619, 111
        %v1146 = vpop.permute.xlu0 %1145
        %1147 = vrot.lane.b32.xlu0 %v620, 111
        %v1148 = vpop.permute.xlu0 %1147
        %1149 = vrot.lane.b32.xlu0 %v621, 111
        %v1150 = vpop.permute.xlu0 %1149
        %vm1151 = vcmp.lt.s32.totalorder %v655, 111
        %v1152 = vsel %vm1151, %v1148, %v1150
        %v1153 = vsel %vm1151, %v1146, %v1148
        %v1154 = vsel %vm1151, %v1144, %v1146
        %v1155 = vsel %vm1151, %v1142, %v1144
        %v1156 = vsel %vm1151, %v1140, %v1142
        %v1157 = vsel %vm1151, %v1138, %v1140
        %v1158 = vsel %vm1151, %v1136, %v1138
        %v1159 = vsel %vm1151, %v1150, %v1136
        %v1160 = vlaneseq
        %v1161 = vshrl.u32 %v1160, 7
        %v1162 = vsub.s32 0, %v1161
        %v1163 = vrot.slane %v630, %v1162
        %v1164 = vlaneseq
        %v1165 = vshrl.u32 %v1164, 7
        %v1166 = vsub.s32 0, %v1165
        %v1167 = vrot.slane %v631, %v1166
        %v1168 = vlaneseq
        %v1169 = vshrl.u32 %v1168, 7
        %v1170 = vsub.s32 0, %v1169
        %v1171 = vrot.slane %v632, %v1170
        %v1172 = vlaneseq
        %v1173 = vshrl.u32 %v1172, 7
        %v1174 = vsub.s32 0, %v1173
        %v1175 = vrot.slane %v633, %v1174
        %v1176 = vlaneseq
        %v1177 = vshrl.u32 %v1176, 7
        %v1178 = vsub.s32 0, %v1177
        %v1179 = vrot.slane %v634, %v1178
        %v1180 = vlaneseq
        %v1181 = vshrl.u32 %v1180, 7
        %v1182 = vsub.s32 0, %v1181
        %v1183 = vrot.slane %v635, %v1182
        %v1184 = vlaneseq
        %v1185 = vshrl.u32 %v1184, 7
        %v1186 = vsub.s32 0, %v1185
        %v1187 = vrot.slane %v636, %v1186
        %v1188 = vlaneseq
        %v1189 = vshrl.u32 %v1188, 7
        %v1190 = vsub.s32 0, %v1189
        %v1191 = vrot.slane %v637, %v1190
        %v1192 = vmul.f32 %v1158, %v1163
        %v1193 = vmul.f32 %v1157, %v1167
        %v1194 = vmul.f32 %v1156, %v1171
        %v1195 = vmul.f32 %v1155, %v1175
        %v1196 = vmul.f32 %v1154, %v1179
        %v1197 = vmul.f32 %v1153, %v1183
        %v1198 = vmul.f32 %v1152, %v1187
        %v1199 = vmul.f32 %v1159, %v1191
        %v1200 = vld [vmem:[%s3] sm:$0xff]
        %v1201 = vld [vmem:[%s3 + $0x8] sm:$0xff]
        %v1202 = vld [vmem:[%s3 + $0x10] sm:$0xff]
        %v1203 = vld [vmem:[%s3 + $0x18] sm:$0xff]
        %v1204 = vld [vmem:[%s4] sm:$0xff]
        %v1205 = vld [vmem:[%s4 + $0x8] sm:$0xff]
        %v1206 = vld [vmem:[%s4 + $0x10] sm:$0xff]
        %v1207 = vld [vmem:[%s4 + $0x18] sm:$0xff]
        %1209 = vset.pattern.permute.xlu0 0
        %1210 = vperm.xlu0 %1209, %v1204
        %v1211 = vpop.permute.xlu0 %1210
        %1214 = vset.pattern.permute.xlu0 0
        %1215 = vperm.xlu0 %1214, %v1205
        %v1216 = vpop.permute.xlu0 %1215
        %1219 = vset.pattern.permute.xlu0 0
        %1220 = vperm.xlu0 %1219, %v1206
        %v1221 = vpop.permute.xlu0 %1220
        %1224 = vset.pattern.permute.xlu0 0
        %1225 = vperm.xlu0 %1224, %v1207
        %v1226 = vpop.permute.xlu0 %1225
        %vm1228 = vcmask 588800
        %v1230 = vsel %vm1228, %v1200, 0
        %v1233 = vsel %vm1228, %v1201, 0
        %v1236 = vsel %vm1228, %v1202, 0
        %v1239 = vsel %vm1228, %v1203, 0
        %1241 = vmatprep.subr.mxu0 %v698
        %1242 = vmatpush1.msra.mxu0 %v697
        %1243 = vmatprep.subr.mxu0 %v763
        %1244 = vmatpush1.msra.mxu0 %v762
        %1245 = vmatprep.subr.mxu0 %v828
        %1246 = vmatpush1.msra.mxu0 %v827
        %1247 = vmatprep.subr.mxu0 %v893
        %1248 = vmatpush1.msra.mxu0 %v892
        %1249 = vmatprep.subr.mxu0 %v933
        %1250 = vmatpush1.msra.mxu0 %v932
        %1251 = vmatprep.subr.mxu0 %v998
        %1252 = vmatpush1.msra.mxu0 %v997
        %1253 = vmatprep.subr.mxu0 %v1063
        %1254 = vmatpush1.msra.mxu0 %v1062
        %1255 = vmatprep.subr.mxu0 %v1128
        %1256 = vmatpush1.msra.mxu0 %v1127
        %1257 = vmatprep.subr.mxu0 %v1193
        %1258 = vmatpush1.msra.mxu0 %v1192
        %1259 = vmatprep.subr.mxu0 0.0
        %1260 = vmatpush1.msra.mxu0 0.0
        %1261 = vmatprep.subr.mxu0 0.0
        %1262 = vmatpush1.msra.mxu0 0.0
        %1263 = vmatprep.subr.mxu0 0.0
        %1264 = vmatpush1.msra.mxu0 0.0
        %1265 = vmatprep.subr.mxu0 0.0
        %1266 = vmatpush1.msra.mxu0 0.0
        %1267 = vmatprep.subr.mxu0 0.0
        %1268 = vmatpush1.msra.mxu0 0.0
        %1269 = vmatprep.subr.mxu0 0.0
        %1270 = vmatpush1.msra.mxu0 0.0
        %1271 = vmatprep.subr.mxu0 0.0
        %1272 = vmatpush1.msra.mxu0 0.0
        %1273 = vmatprep.subr.mxu0 0.0
        %1274 = vmatpush1.msra.mxu0 0.0
        %1275 = vmatprep.subr.mxu0 0.0
        %1276 = vmatpush1.msra.mxu0 0.0
        %1277 = vmatprep.subr.mxu0 0.0
        %1278 = vmatpush1.msra.mxu0 0.0
        %1279 = vmatprep.subr.mxu0 0.0
        %1280 = vmatpush1.msra.mxu0 0.0
        %1281 = vmatprep.subr.mxu0 0.0
        %1282 = vmatpush1.msra.mxu0 0.0
        %1283 = vmatprep.subr.mxu0 0.0
        %1284 = vmatpush1.msra.mxu0 0.0
        %1285 = vmatprep.subr.mxu0 0.0
        %1286 = vmatpush1.msra.mxu0 0.0
        %1287 = vmatprep.subr.mxu0 0.0
        %1288 = vmatpush1.msra.mxu0 0.0
        %1289 = vmatprep.subr.mxu0 0.0
        %1290 = vmatpush1.msra.mxu0 0.0
        %1291 = vmatprep.subr.mxu0 0.0
        %1292 = vmatpush1.msra.mxu0 0.0
        %1293 = vmatprep.subr.mxu0 0.0
        %1294 = vmatpush1.msra.mxu0 0.0
        %1295 = vmatprep.subr.mxu0 0.0
        %1296 = vmatpush1.msra.mxu0 0.0
        %1297 = vmatprep.subr.mxu0 0.0
        %1298 = vmatpush1.msra.mxu0 0.0
        %1299 = vmatprep.subr.mxu0 0.0
        %1300 = vmatpush1.msra.mxu0 0.0
        %1301 = vmatprep.subr.mxu0 0.0
        %1302 = vmatpush1.msra.mxu0 0.0
        %1303 = vmatprep.subr.mxu0 0.0
        %1304 = vmatpush1.msra.mxu0 0.0
        %1305 = vmatprep.mubr.f32.mxu0 0.0
        %1306 = vmatmul.mubr.f32.gmra.mrb[0].mxu0 %v1230
        %v1307 = vpop.f32.mrb[0].mxu0
        %v1308 = vadd.f32 %v1211, %v1307
        %v1309 = vpop.f32.mrb[0].mxu0
        %v1310 = vadd.f32 %v1211, %v1309
        %1311 = vmatprep.mubr.f32.mxu0 0.0
        %1312 = vmatmul.mubr.f32.gmra.mrb[0].mxu0 %v1233
        %v1313 = vpop.f32.mrb[0].mxu0
        %v1314 = vadd.f32 %v1216, %v1313
        %v1315 = vpop.f32.mrb[0].mxu0
        %v1316 = vadd.f32 %v1216, %v1315
        %1317 = vmatprep.mubr.f32.mxu0 0.0
        %1318 = vmatmul.mubr.f32.gmra.mrb[0].mxu0 %v1236
        %v1319 = vpop.f32.mrb[0].mxu0
        %v1320 = vadd.f32 %v1221, %v1319
        %v1321 = vpop.f32.mrb[0].mxu0
        %v1322 = vadd.f32 %v1221, %v1321
        %1323 = vmatprep.mubr.f32.mxu0 0.0
        %1324 = vmatmul.mubr.f32.gmra.mrb[0].mxu0 %v1239
        %v1325 = vpop.f32.mrb[0].mxu0
        %v1326 = vadd.f32 %v1226, %v1325
        %v1327 = vpop.f32.mrb[0].mxu0
        %v1328 = vadd.f32 %v1226, %v1327
        %1329 = vdwg.mxu0
        %1330 = vmatprep.subr.mxu0 %v700
        %1331 = vmatpush1.msra.mxu0 %v699
        %1332 = vmatprep.subr.mxu0 %v765
        %1333 = vmatpush1.msra.mxu0 %v764
        %1334 = vmatprep.subr.mxu0 %v830
        %1335 = vmatpush1.msra.mxu0 %v829
        %1336 = vmatprep.subr.mxu0 %v895
        %1337 = vmatpush1.msra.mxu0 %v894
        %1338 = vmatprep.subr.mxu0 %v935
        %1339 = vmatpush1.msra.mxu0 %v934
        %1340 = vmatprep.subr.mxu0 %v1000
        %1341 = vmatpush1.msra.mxu0 %v999
        %1342 = vmatprep.subr.mxu0 %v1065
        %1343 = vmatpush1.msra.mxu0 %v1064
        %1344 = vmatprep.subr.mxu0 %v1130
        %1345 = vmatpush1.msra.mxu0 %v1129
        %1346 = vmatprep.subr.mxu0 %v1195
        %1347 = vmatpush1.msra.mxu0 %v1194
        %1348 = vmatprep.subr.mxu0 0.0
        %1349 = vmatpush1.msra.mxu0 0.0
        %1350 = vmatprep.subr.mxu0 0.0
        %1351 = vmatpush1.msra.mxu0 0.0
        %1352 = vmatprep.subr.mxu0 0.0
        %1353 = vmatpush1.msra.mxu0 0.0
        %1354 = vmatprep.subr.mxu0 0.0
        %1355 = vmatpush1.msra.mxu0 0.0
        %1356 = vmatprep.subr.mxu0 0.0
        %1357 = vmatpush1.msra.mxu0 0.0
        %1358 = vmatprep.subr.mxu0 0.0
        %1359 = vmatpush1.msra.mxu0 0.0
        %1360 = vmatprep.subr.mxu0 0.0
        %1361 = vmatpush1.msra.mxu0 0.0
        %1362 = vmatprep.subr.mxu0 0.0
        %1363 = vmatpush1.msra.mxu0 0.0
        %1364 = vmatprep.subr.mxu0 0.0
        %1365 = vmatpush1.msra.mxu0 0.0
        %1366 = vmatprep.subr.mxu0 0.0
        %1367 = vmatpush1.msra.mxu0 0.0
        %1368 = vmatprep.subr.mxu0 0.0
        %1369 = vmatpush1.msra.mxu0 0.0
        %1370 = vmatprep.subr.mxu0 0.0
        %1371 = vmatpush1.msra.mxu0 0.0
        %1372 = vmatprep.subr.mxu0 0.0
        %1373 = vmatpush1.msra.mxu0 0.0
        %1374 = vmatprep.subr.mxu0 0.0
        %1375 = vmatpush1.msra.mxu0 0.0
        %1376 = vmatprep.subr.mxu0 0.0
        %1377 = vmatpush1.msra.mxu0 0.0
        %1378 = vmatprep.subr.mxu0 0.0
        %1379 = vmatpush1.msra.mxu0 0.0
        %1380 = vmatprep.subr.mxu0 0.0
        %1381 = vmatpush1.msra.mxu0 0.0
        %1382 = vmatprep.subr.mxu0 0.0
        %1383 = vmatpush1.msra.mxu0 0.0
        %1384 = vmatprep.subr.mxu0 0.0
        %1385 = vmatpush1.msra.mxu0 0.0
        %1386 = vmatprep.subr.mxu0 0.0
        %1387 = vmatpush1.msra.mxu0 0.0
        %1388 = vmatprep.subr.mxu0 0.0
        %1389 = vmatpush1.msra.mxu0 0.0
        %1390 = vmatprep.subr.mxu0 0.0
        %1391 = vmatpush1.msra.mxu0 0.0
        %1392 = vmatprep.subr.mxu0 0.0
        %1393 = vmatpush1.msra.mxu0 0.0
        %1394 = vmatprep.mubr.f32.mxu0 0.0
        %1395 = vmatmul.mubr.f32.gmra.mrb[0].mxu0 %v1230
        %v1396 = vpop.f32.mrb[0].mxu0
        %v1397 = vadd.f32 %v1211, %v1396
        %v1398 = vpop.f32.mrb[0].mxu0
        %v1399 = vadd.f32 %v1211, %v1398
        %1400 = vmatprep.mubr.f32.mxu0 0.0
        %1401 = vmatmul.mubr.f32.gmra.mrb[0].mxu0 %v1233
        %v1402 = vpop.f32.mrb[0].mxu0
        %v1403 = vadd.f32 %v1216, %v1402
        %v1404 = vpop.f32.mrb[0].mxu0
        %v1405 = vadd.f32 %v1216, %v1404
        %1406 = vmatprep.mubr.f32.mxu0 0.0
        %1407 = vmatmul.mubr.f32.gmra.mrb[0].mxu0 %v1236
        %v1408 = vpop.f32.mrb[0].mxu0
        %v1409 = vadd.f32 %v1221, %v1408
        %v1410 = vpop.f32.mrb[0].mxu0
        %v1411 = vadd.f32 %v1221, %v1410
        %1412 = vmatprep.mubr.f32.mxu0 0.0
        %1413 = vmatmul.mubr.f32.gmra.mrb[0].mxu0 %v1239
        %v1414 = vpop.f32.mrb[0].mxu0
        %v1415 = vadd.f32 %v1226, %v1414
        %v1416 = vpop.f32.mrb[0].mxu0
        %v1417 = vadd.f32 %v1226, %v1416
        %1418 = vdwg.mxu0
        %1419 = vmatprep.subr.mxu0 %v702
        %1420 = vmatpush1.msra.mxu0 %v701
        %1421 = vmatprep.subr.mxu0 %v767
        %1422 = vmatpush1.msra.mxu0 %v766
        %1423 = vmatprep.subr.mxu0 %v832
        %1424 = vmatpush1.msra.mxu0 %v831
        %1425 = vmatprep.subr.mxu0 %v897
        %1426 = vmatpush1.msra.mxu0 %v896
        %1427 = vmatprep.subr.mxu0 %v937
        %1428 = vmatpush1.msra.mxu0 %v936
        %1429 = vmatprep.subr.mxu0 %v1002
        %1430 = vmatpush1.msra.mxu0 %v1001
        %1431 = vmatprep.subr.mxu0 %v1067
        %1432 = vmatpush1.msra.mxu0 %v1066
        %1433 = vmatprep.subr.mxu0 %v1132
        %1434 = vmatpush1.msra.mxu0 %v1131
        %1435 = vmatprep.subr.mxu0 %v1197
        %1436 = vmatpush1.msra.mxu0 %v1196
        %1437 = vmatprep.subr.mxu0 0.0
        %1438 = vmatpush1.msra.mxu0 0.0
        %1439 = vmatprep.subr.mxu0 0.0
        %1440 = vmatpush1.msra.mxu0 0.0
        %1441 = vmatprep.subr.mxu0 0.0
        %1442 = vmatpush1.msra.mxu0 0.0
        %1443 = vmatprep.subr.mxu0 0.0
        %1444 = vmatpush1.msra.mxu0 0.0
        %1445 = vmatprep.subr.mxu0 0.0
        %1446 = vmatpush1.msra.mxu0 0.0
        %1447 = vmatprep.subr.mxu0 0.0
        %1448 = vmatpush1.msra.mxu0 0.0
        %1449 = vmatprep.subr.mxu0 0.0
        %1450 = vmatpush1.msra.mxu0 0.0
        %1451 = vmatprep.subr.mxu0 0.0
        %1452 = vmatpush1.msra.mxu0 0.0
        %1453 = vmatprep.subr.mxu0 0.0
        %1454 = vmatpush1.msra.mxu0 0.0
        %1455 = vmatprep.subr.mxu0 0.0
        %1456 = vmatpush1.msra.mxu0 0.0
        %1457 = vmatprep.subr.mxu0 0.0
        %1458 = vmatpush1.msra.mxu0 0.0
        %1459 = vmatprep.subr.mxu0 0.0
        %1460 = vmatpush1.msra.mxu0 0.0
        %1461 = vmatprep.subr.mxu0 0.0
        %1462 = vmatpush1.msra.mxu0 0.0
        %1463 = vmatprep.subr.mxu0 0.0
        %1464 = vmatpush1.msra.mxu0 0.0
        %1465 = vmatprep.subr.mxu0 0.0
        %1466 = vmatpush1.msra.mxu0 0.0
        %1467 = vmatprep.subr.mxu0 0.0
        %1468 = vmatpush1.msra.mxu0 0.0
        %1469 = vmatprep.subr.mxu0 0.0
        %1470 = vmatpush1.msra.mxu0 0.0
        %1471 = vmatprep.subr.mxu0 0.0
        %1472 = vmatpush1.msra.mxu0 0.0
        %1473 = vmatprep.subr.mxu0 0.0
        %1474 = vmatpush1.msra.mxu0 0.0
        %1475 = vmatprep.subr.mxu0 0.0
        %1476 = vmatpush1.msra.mxu0 0.0
        %1477 = vmatprep.subr.mxu0 0.0
        %1478 = vmatpush1.msra.mxu0 0.0
        %1479 = vmatprep.subr.mxu0 0.0
        %1480 = vmatpush1.msra.mxu0 0.0
        %1481 = vmatprep.subr.mxu0 0.0
        %1482 = vmatpush1.msra.mxu0 0.0
        %1483 = vmatprep.mubr.f32.mxu0 0.0
        %1484 = vmatmul.mubr.f32.gmra.mrb[0].mxu0 %v1230
        %v1485 = vpop.f32.mrb[0].mxu0
        %v1486 = vadd.f32 %v1211, %v1485
        %v1487 = vpop.f32.mrb[0].mxu0
        %v1488 = vadd.f32 %v1211, %v1487
        %1489 = vmatprep.mubr.f32.mxu0 0.0
        %1490 = vmatmul.mubr.f32.gmra.mrb[0].mxu0 %v1233
        %v1491 = vpop.f32.mrb[0].mxu0
        %v1492 = vadd.f32 %v1216, %v1491
        %v1493 = vpop.f32.mrb[0].mxu0
        %v1494 = vadd.f32 %v1216, %v1493
        %1495 = vmatprep.mubr.f32.mxu0 0.0
        %1496 = vmatmul.mubr.f32.gmra.mrb[0].mxu0 %v1236
        %v1497 = vpop.f32.mrb[0].mxu0
        %v1498 = vadd.f32 %v1221, %v1497
        %v1499 = vpop.f32.mrb[0].mxu0
        %v1500 = vadd.f32 %v1221, %v1499
        %1501 = vmatprep.mubr.f32.mxu0 0.0
        %1502 = vmatmul.mubr.f32.gmra.mrb[0].mxu0 %v1239
        %v1503 = vpop.f32.mrb[0].mxu0
        %v1504 = vadd.f32 %v1226, %v1503
        %v1505 = vpop.f32.mrb[0].mxu0
        %v1506 = vadd.f32 %v1226, %v1505
        %1507 = vdwg.mxu0
        %1508 = vmatprep.subr.mxu0 %v704
        %1509 = vmatpush1.msra.mxu0 %v703
        %1510 = vmatprep.subr.mxu0 %v769
        %1511 = vmatpush1.msra.mxu0 %v768
        %1512 = vmatprep.subr.mxu0 %v834
        %1513 = vmatpush1.msra.mxu0 %v833
        %1514 = vmatprep.subr.mxu0 %v899
        %1515 = vmatpush1.msra.mxu0 %v898
        %1516 = vmatprep.subr.mxu0 %v939
        %1517 = vmatpush1.msra.mxu0 %v938
        %1518 = vmatprep.subr.mxu0 %v1004
        %1519 = vmatpush1.msra.mxu0 %v1003
        %1520 = vmatprep.subr.mxu0 %v1069
        %1521 = vmatpush1.msra.mxu0 %v1068
        %1522 = vmatprep.subr.mxu0 %v1134
        %1523 = vmatpush1.msra.mxu0 %v1133
        %1524 = vmatprep.subr.mxu0 %v1199
        %1525 = vmatpush1.msra.mxu0 %v1198
        %1526 = vmatprep.subr.mxu0 0.0
        %1527 = vmatpush1.msra.mxu0 0.0
        %1528 = vmatprep.subr.mxu0 0.0
        %1529 = vmatpush1.msra.mxu0 0.0
        %1530 = vmatprep.subr.mxu0 0.0
        %1531 = vmatpush1.msra.mxu0 0.0
        %1532 = vmatprep.subr.mxu0 0.0
        %1533 = vmatpush1.msra.mxu0 0.0
        %1534 = vmatprep.subr.mxu0 0.0
        %1535 = vmatpush1.msra.mxu0 0.0
        %1536 = vmatprep.subr.mxu0 0.0
        %1537 = vmatpush1.msra.mxu0 0.0
        %1538 = vmatprep.subr.mxu0 0.0
        %1539 = vmatpush1.msra.mxu0 0.0
        %1540 = vmatprep.subr.mxu0 0.0
        %1541 = vmatpush1.msra.mxu0 0.0
        %1542 = vmatprep.subr.mxu0 0.0
        %1543 = vmatpush1.msra.mxu0 0.0
        %1544 = vmatprep.subr.mxu0 0.0
        %1545 = vmatpush1.msra.mxu0 0.0
        %1546 = vmatprep.subr.mxu0 0.0
        %1547 = vmatpush1.msra.mxu0 0.0
        %1548 = vmatprep.subr.mxu0 0.0
        %1549 = vmatpush1.msra.mxu0 0.0
        %1550 = vmatprep.subr.mxu0 0.0
        %1551 = vmatpush1.msra.mxu0 0.0
        %1552 = vmatprep.subr.mxu0 0.0
        %1553 = vmatpush1.msra.mxu0 0.0
        %1554 = vmatprep.subr.mxu0 0.0
        %1555 = vmatpush1.msra.mxu0 0.0
        %1556 = vmatprep.subr.mxu0 0.0
        %1557 = vmatpush1.msra.mxu0 0.0
        %1558 = vmatprep.subr.mxu0 0.0
        %1559 = vmatpush1.msra.mxu0 0.0
        %1560 = vmatprep.subr.mxu0 0.0
        %1561 = vmatpush1.msra.mxu0 0.0
        %1562 = vmatprep.subr.mxu0 0.0
        %1563 = vmatpush1.msra.mxu0 0.0
        %1564 = vmatprep.subr.mxu0 0.0
        %1565 = vmatpush1.msra.mxu0 0.0
        %1566 = vmatprep.subr.mxu0 0.0
        %1567 = vmatpush1.msra.mxu0 0.0
        %1568 = vmatprep.subr.mxu0 0.0
        %1569 = vmatpush1.msra.mxu0 0.0
        %1570 = vmatprep.subr.mxu0 0.0
        %1571 = vmatpush1.msra.mxu0 0.0
        %1572 = vmatprep.mubr.f32.mxu0 0.0
        %1573 = vmatmul.mubr.f32.gmra.mrb[0].mxu0 %v1230
        %v1574 = vpop.f32.mrb[0].mxu0
        %v1575 = vadd.f32 %v1211, %v1574
        %v1576 = vpop.f32.mrb[0].mxu0
        %v1577 = vadd.f32 %v1211, %v1576
        %1578 = vmatprep.mubr.f32.mxu0 0.0
        %1579 = vmatmul.mubr.f32.gmra.mrb[0].mxu0 %v1233
        %v1580 = vpop.f32.mrb[0].mxu0
        %v1581 = vadd.f32 %v1216, %v1580
        %v1582 = vpop.f32.mrb[0].mxu0
        %v1583 = vadd.f32 %v1216, %v1582
        %1584 = vmatprep.mubr.f32.mxu0 0.0
        %1585 = vmatmul.mubr.f32.gmra.mrb[0].mxu0 %v1236
        %v1586 = vpop.f32.mrb[0].mxu0
        %v1587 = vadd.f32 %v1221, %v1586
        %v1588 = vpop.f32.mrb[0].mxu0
        %v1589 = vadd.f32 %v1221, %v1588
        %1590 = vmatprep.mubr.f32.mxu0 0.0
        %1591 = vmatmul.mubr.f32.gmra.mrb[0].mxu0 %v1239
        %v1592 = vpop.f32.mrb[0].mxu0
        %v1593 = vadd.f32 %v1226, %v1592
        %v1594 = vpop.f32.mrb[0].mxu0
        %v1595 = vadd.f32 %v1226, %v1594
        %1596 = vdwg.mxu0
        %v1597 = vadd.f32 %v287, %v1308
        %v1598 = vadd.f32 %v288, %v1310
        %v1599 = vadd.f32 %v289, %v1397
        %v1600 = vadd.f32 %v290, %v1399
        %v1601 = vadd.f32 %v291, %v1486
        %v1602 = vadd.f32 %v292, %v1488
        %v1603 = vadd.f32 %v293, %v1575
        %v1604 = vadd.f32 %v294, %v1577
        %v1605 = vadd.f32 %v295, %v1314
        %v1606 = vadd.f32 %v296, %v1316
        %v1607 = vadd.f32 %v297, %v1403
        %v1608 = vadd.f32 %v298, %v1405
        %v1609 = vadd.f32 %v299, %v1492
        %v1610 = vadd.f32 %v300, %v1494
        %v1611 = vadd.f32 %v301, %v1581
        %v1612 = vadd.f32 %v302, %v1583
        %v1613 = vadd.f32 %v303, %v1320
        %v1614 = vadd.f32 %v304, %v1322
        %v1615 = vadd.f32 %v305, %v1409
        %v1616 = vadd.f32 %v306, %v1411
        %v1617 = vadd.f32 %v307, %v1498
        %v1618 = vadd.f32 %v308, %v1500
        %v1619 = vadd.f32 %v309, %v1587
        %v1620 = vadd.f32 %v310, %v1589
        %v1621 = vadd.f32 %v311, %v1326
        %v1622 = vadd.f32 %v312, %v1328
        %v1623 = vadd.f32 %v313, %v1415
        %v1624 = vadd.f32 %v314, %v1417
        %v1625 = vadd.f32 %v315, %v1504
        %v1626 = vadd.f32 %v316, %v1506
        %v1627 = vadd.f32 %v317, %v1593
        %v1628 = vadd.f32 %v318, %v1595
        %1629 = vst [vmem:[%s284] sm:$0xff] %v1597
        %1630 = vst [vmem:[%s284 + $0x8] sm:$0xff] %v1598
        %1631 = vst [vmem:[%s284 + $0x10] sm:$0xff] %v1599
        %1632 = vst [vmem:[%s284 + $0x18] sm:$0xff] %v1600
        %1633 = vst [vmem:[%s284 + $0x20] sm:$0xff] %v1601
        %1634 = vst [vmem:[%s284 + $0x28] sm:$0xff] %v1602
        %1635 = vst [vmem:[%s284 + $0x30] sm:$0xff] %v1603
        %1636 = vst [vmem:[%s284 + $0x38] sm:$0xff] %v1604
        %1637 = vst [vmem:[%s284 + $0x40] sm:$0xff] %v1605
        %1638 = vst [vmem:[%s284 + $0x48] sm:$0xff] %v1606
        %1639 = vst [vmem:[%s284 + $0x50] sm:$0xff] %v1607
        %1640 = vst [vmem:[%s284 + $0x58] sm:$0xff] %v1608
        %1641 = vst [vmem:[%s284 + $0x60] sm:$0xff] %v1609
        %1642 = vst [vmem:[%s284 + $0x68] sm:$0xff] %v1610
        %1643 = vst [vmem:[%s284 + $0x70] sm:$0xff] %v1611
        %1644 = vst [vmem:[%s284 + $0x78] sm:$0xff] %v1612
        %1645 = vst [vmem:[%s284 + $0x80] sm:$0xff] %v1613
        %1646 = vst [vmem:[%s284 + $0x88] sm:$0xff] %v1614
        %1647 = vst [vmem:[%s284 + $0x90] sm:$0xff] %v1615
        %1648 = vst [vmem:[%s284 + $0x98] sm:$0xff] %v1616
        %1649 = vst [vmem:[%s284 + $0xa0] sm:$0xff] %v1617
        %1650 = vst [vmem:[%s284 + $0xa8] sm:$0xff] %v1618
        %1651 = vst [vmem:[%s284 + $0xb0] sm:$0xff] %v1619
        %1652 = vst [vmem:[%s284 + $0xb8] sm:$0xff] %v1620
        %1653 = vst [vmem:[%s284 + $0xc0] sm:$0xff] %v1621
        %1654 = vst [vmem:[%s284 + $0xc8] sm:$0xff] %v1622
        %1655 = vst [vmem:[%s284 + $0xd0] sm:$0xff] %v1623
        %1656 = vst [vmem:[%s284 + $0xd8] sm:$0xff] %v1624
        %1657 = vst [vmem:[%s284 + $0xe0] sm:$0xff] %v1625
        %1658 = vst [vmem:[%s284 + $0xe8] sm:$0xff] %v1626
        %1659 = vst [vmem:[%s284 + $0xf0] sm:$0xff] %v1627
        %1660 = vst [vmem:[%s284 + $0xf8] sm:$0xff] %v1628
        %s1661 = sand.u32 %s163, 1
        %s1662 = scalar_lea.sflag [#allocation4], %s1661
        %s1663 = sand.u32 %s163, 1
        %s1664 = smul.addr %s1663, 256
        %s1665 = scalar_lea.vmem [#allocation7], %s1664
        // Predicated region
        $region53: #{tpu_custom_call.1} parent=43 // pred_check
          %p1666 = pneg %p173
        $region54: #{tpu_custom_call.1} parent=43 // pred_check_branch
          %1668 = sbr.rel (%p1666) target = $region56
        $region55: #{tpu_custom_call.1} parent=43 // pred_region
          %s1669 = smul.u32 8, %s24
          %s1671 = ssub.s32 4096, 4096
          %1672 = vsyncadd %s1662, %s1671
          %s1673 = smul.addr %s1669, 128
          %s1674 = scalar_lea.hbm %s6, %s1673
          %s1675 = sshll.u32 %s1665, 4
          %s1676 = int_to_ptr.vmem [resolvable:$true] %s1675
          %1681 = dma.vmem_to_hbm [thread:$0]  %s1676, 4096, %s1674, %s1662, 1024, 2048, 64
        $region56: #{tpu_custom_call.1} parent=43 // pred_fallthru
          _
      $region44: #{tpu_custom_call.1} parent=5 // pred_fallthru
        _
      %p1682 = scmp.le.s32.totalorder 2, %s19
      // Predicated region
      $region57: #{tpu_custom_call.1} parent=5 // pred_check
        %p1683 = pneg %p1682
      $region58: #{tpu_custom_call.1} parent=5 // pred_check_branch
        %1685 = sbr.rel (%p1683) target = $region60
      $region59: #{tpu_custom_call.1} parent=5 // pred_region
        %s1686 = ssub.s32 %s19, 2
        // Predicated region
        $region61: #{tpu_custom_call.1} parent=59 // pred_check
          %p1687 = pneg %p179
        $region62: #{tpu_custom_call.1} parent=59 // pred_check_branch
          %1689 = sbr.rel (%p1687) target = $region64
        $region63: #{tpu_custom_call.1} parent=59 // pred_region
          %s1690 = sand.u32 %s164, 1
          %s1691 = scalar_lea.sflag [#allocation4], %s1690
          %s1692 = sand.u32 %s164, 1
          %s1693 = smul.addr %s1692, 256
          %s1694 = scalar_lea.vmem [#allocation7], %s1693
          %1695 = dma.done %s1691, 4096
        $region64: #{tpu_custom_call.1} parent=59 // pred_fallthru
          _
      $region60: #{tpu_custom_call.1} parent=5 // pred_fallthru
        _
    $region6: #{tpu_custom_call.1} parent=1 // loop_footer
      %s23 = sadd.s32 1, %s19
    $region7: #{tpu_custom_call.1} parent=1 // loop_footer_branch
      %18 = sbr.rel target = $region3
    $region8: #{tpu_custom_call.1} parent=1 // loop_exit
      _
    %1696 = vsyncpa [#allocation3], 1
    %s1697 = scalar_lea.sflag [#allocation3], 1
    %1698 = vsyncpa %s1697, 1
    %1699 = vsyncpa [#allocation6], 1
    %1700 = vsyncpa [#allocation4], 1
    %s1701 = scalar_lea.sflag [#allocation4], 1
    %1702 = vsyncpa %s1701, 1

</llo_original>
